<compile_context>
chip_gen: v7x
topology: tpu7x:2x2x1
jax: 0.10.0
libtpu: 0.0.40
codegen_flags: <defaults>
</compile_context>

<pallas_src>
import math
import functools

import jax
import jax.numpy as jnp
from jax.experimental import pallas as pl
from jax.experimental.pallas import tpu as pltpu


def _rope_tables(T, D, num_heads, head_dim, rope_dims, base):
    """Full-width (T, D) tables so RoPE becomes two lane rolls + three FMAs.

    For column j with m = j % head_dim:
      m in [0, rd2):    rot = x*cos(th_m)        + roll(x,+rd2)*(-sin(th_m))
      m in [rd2, rd):   rot = x*cos(th_{m-rd2})  + roll(x,-rd2)*(+sin(th_{m-rd2}))
      m >= rd:          rot = x                     (pass-through)
    """
    rd = rope_dims
    rd2 = rd // 2
    positions = jnp.arange(T, dtype=jnp.float32)
    freqs = jnp.exp(-jnp.arange(rd2, dtype=jnp.float32) * (math.log(base) / rd2))
    theta = positions[:, None] * freqs[None, :]                    # (T, rd2)
    cos = jnp.cos(theta)
    sin = jnp.sin(theta)
    zeros = jnp.zeros_like(sin)
    tail_ones = jnp.ones((T, head_dim - rd), jnp.float32)
    tail_zeros = jnp.zeros((T, head_dim - rd), jnp.float32)

    cos_h = jnp.concatenate([cos, cos, tail_ones], axis=1)         # (T, head_dim)
    sinm_h = jnp.concatenate([-sin, zeros, tail_zeros], axis=1)    # pairs with roll(+rd2)
    sinp_h = jnp.concatenate([zeros, sin, tail_zeros], axis=1)     # pairs with roll(-rd2)

    tile = lambda a: jnp.tile(a, (1, num_heads))                   # (T, D)
    return tile(cos_h), tile(sinm_h), tile(sinp_h)


def _phi_mha_kernel(x_ref, wqkv_ref, wd_ref, bqkv_ref, bd_ref,
                    cosf_ref, sinm_ref, sinp_ref,
                    out_ref, ctx_ref,
                    *, num_heads, head_dim, rope_dims):
    """One batch element per grid step.

    x_ref:    (1, T, D)   bf16
    wqkv_ref: (D, 3D)     bf16  (columns: [Wq^T*scale | Wk^T | Wv^T])
    wd_ref:   (D, D)      bf16
    bqkv_ref: (1, 3D)     f32
    bd_ref:   (1, D)      f32
    cos/sin:  (T, D)      f32
    out_ref:  (1, T, D)
    ctx_ref:  (T, D)      f32 VMEM scratch (per-head attention context)
    """
    D = num_heads * head_dim
    rd2 = rope_dims // 2

    # --- fused QKV projection: one big MXU matmul, f32 accumulate, bias once ---
    x_b = x_ref[0]                                                 # (T, D) bf16
    qkv = jnp.dot(x_b, wqkv_ref[...],
                  preferred_element_type=jnp.float32)              # (T, 3D) f32
    qkv = qkv + bqkv_ref[...]

    q = qkv[:, :D]               # already scaled by 1/sqrt(head_dim) (folded in wrapper)
    k = qkv[:, D:2 * D]
    v = qkv[:, 2 * D:]

    # --- partial RoPE, full width, roll-based (no concatenates) ---
    cosf = cosf_ref[...]
    sinm = sinm_ref[...]
    sinp = sinp_ref[...]

    def rope(t):
        t_fwd = pltpu.roll(t, D - rd2, axis=1)   # t_fwd[:, j] = t[:, (j + rd2) % D]
        t_bwd = pltpu.roll(t, rd2, axis=1)       # t_bwd[:, j] = t[:, (j - rd2) % D]
        return t * cosf + t_fwd * sinm + t_bwd * sinp

    qb = rope(q).astype(jnp.bfloat16)
    kb = rope(k).astype(jnp.bfloat16)
    vb = v.astype(jnp.bfloat16)

    # --- per-head attention; each head's context goes straight to VMEM scratch ---
    # (num_heads is small here; for many heads this should become a grid axis.)
    for h in range(num_heads):
        lo = h * head_dim
        hi = lo + head_dim
        q_h = qb[:, lo:hi]
        k_h = kb[:, lo:hi]
        v_h = vb[:, lo:hi]

        s = jax.lax.dot_general(q_h, k_h, (((1,), (1,)), ((), ())),
                                preferred_element_type=jnp.float32)   # (T, T) f32
        m = jnp.max(s, axis=-1, keepdims=True)
        p = jnp.exp(s - m)
        l = jnp.sum(p, axis=-1, keepdims=True)
        o = jnp.dot(p.astype(jnp.bfloat16), v_h,
                    preferred_element_type=jnp.float32)               # (T, head_dim)
        o = o * pl.reciprocal(l, approx=True)    # normalize (T, hd), not (T, T)
        ctx_ref[:, lo:hi] = o

    # --- single full-width dense projection ---
    ctx = ctx_ref[...].astype(jnp.bfloat16)
    out = jnp.dot(ctx, wd_ref[...], preferred_element_type=jnp.float32)
    out_ref[0] = (out + bd_ref[...]).astype(out_ref.dtype)


def phi_mha_forward(x, params, *, num_heads, rope_dims, base=10000.0):
    """x: (B, T, D) float32.  params: dict of PyTorch-layout (out, in) weights + biases."""
    B, T, D = x.shape
    head_dim = D // num_heads
    scale = math.sqrt(1.0 / head_dim)

    # Weight prep (PyTorch (out,in) -> (in,out)); fold attention scale into Q; bf16 cast.
    wq_t = params["q_w"].T * scale
    wk_t = params["k_w"].T
    wv_t = params["v_w"].T
    wqkv_t = jnp.concatenate([wq_t, wk_t, wv_t], axis=1).astype(jnp.bfloat16)   # (D, 3D)
    bqkv = jnp.concatenate([params["q_b"] * scale, params["k_b"], params["v_b"]]
                           ).reshape(1, 3 * D).astype(jnp.float32)
    wd_t = params["d_w"].T.astype(jnp.bfloat16)                                 # (D, D)
    bd = params["d_b"].reshape(1, D).astype(jnp.float32)

    cosf, sinm, sinp = _rope_tables(T, D, num_heads, head_dim, rope_dims, base)
    x_b = x.astype(jnp.bfloat16)

    kernel = functools.partial(_phi_mha_kernel, num_heads=num_heads,
                               head_dim=head_dim, rope_dims=rope_dims)

    whole = lambda b: (0, 0)
    return pl.pallas_call(
        kernel,
        out_shape=jax.ShapeDtypeStruct((B, T, D), x.dtype),
        grid_spec=pltpu.PrefetchScalarGridSpec(
            num_scalar_prefetch=0,
            grid=(B,),
            in_specs=[
                pl.BlockSpec((1, T, D), lambda b: (b, 0, 0)),   # x (bf16)
                pl.BlockSpec((D, 3 * D), whole),                # fused Wqkv^T (bf16)
                pl.BlockSpec((D, D), whole),                    # Wd^T (bf16)
                pl.BlockSpec((1, 3 * D), whole),                # fused QKV bias (f32)
                pl.BlockSpec((1, D), whole),                    # dense bias (f32)
                pl.BlockSpec((T, D), whole),                    # cos table
                pl.BlockSpec((T, D), whole),                    # -sin table (with +rd2 roll)
                pl.BlockSpec((T, D), whole),                    # +sin table (with -rd2 roll)
            ],
            out_specs=pl.BlockSpec((1, T, D), lambda b: (b, 0, 0)),
            scratch_shapes=[pltpu.VMEM((T, D), jnp.float32)],   # attention context
        ),
        compiler_params=pltpu.CompilerParams(
            dimension_semantics=("parallel",),
            vmem_limit_bytes=64 * 1024 * 1024,
        ),
    )(x_b, wqkv_t, wd_t, bqkv, bd, cosf, sinm, sinp)


def phi_mha_reference(x, params, *, num_heads, rope_dims, base=10000.0):
    """Pure-JAX f32 reference mirroring the PyTorch forward (mask=None, no kv_cache)."""
    B, T, D = x.shape
    head_dim = D // num_heads
    rd2 = rope_dims // 2

    def linear(inp, w, b):
        return inp @ w.T + b

    q = linear(x, params["q_w"], params["q_b"]).reshape(B, T, num_heads, head_dim)
    k = linear(x, params["k_w"], params["k_b"]).reshape(B, T, num_heads, head_dim)
    v = linear(x, params["v_w"], params["v_b"]).reshape(B, T, num_heads, head_dim)
    q = jnp.transpose(q, (0, 2, 1, 3)).astype(jnp.float32)   # (B, H, T, Dh)
    k = jnp.transpose(k, (0, 2, 1, 3)).astype(jnp.float32)
    v = jnp.transpose(v, (0, 2, 1, 3)).astype(jnp.float32)

    positions = jnp.arange(T, dtype=jnp.float32)
    freqs = jnp.exp(-jnp.arange(rd2, dtype=jnp.float32) * (math.log(base) / rd2))
    theta = positions[:, None] * freqs[None, :]
    cos, sin = jnp.cos(theta), jnp.sin(theta)

    def rope(t):
        x1 = t[..., :rd2]
        x2 = t[..., rd2:rope_dims]
        rx1 = x1 * cos - x2 * sin
        rx2 = x1 * sin + x2 * cos
        if rope_dims < t.shape[-1]:
            return jnp.concatenate([rx1, rx2, t[..., rope_dims:]], axis=-1)
        return jnp.concatenate([rx1, rx2], axis=-1)

    q = rope(q)
    k = rope(k)

    scale = math.sqrt(1.0 / head_dim)
    scores = jnp.einsum("bhqd,bhkd->bhqk", q, k) * scale
    scores = jax.nn.softmax(scores, axis=-1)
    out = jnp.einsum("bhqk,bhkd->bhqd", scores, v)
    out = jnp.transpose(out, (0, 2, 1, 3)).reshape(B, T, D).astype(x.dtype)
    return linear(out, params["d_w"], params["d_b"])


if __name__ == "__main__":
    # Config consistent with PhiMHA(layer_idx=0, dim=128, num_heads=4, rotary_dim=0.5):
    # head_dim = 32, rope_dims = 16 (small, but lane-native D=128 / sublane-native T=8).
    B, T, D = 2, 8, 128
    num_heads = 4
    head_dim = D // num_heads
    rope_dims = int(0.5 * head_dim)   # 16

    key = jax.random.PRNGKey(0)
    ks = jax.random.split(key, 9)
    init = lambda k, shape: jax.random.normal(k, shape, dtype=jnp.float32) * 0.05
    params = {
        "q_w": init(ks[0], (D, D)), "q_b": init(ks[1], (D,)),
        "k_w": init(ks[2], (D, D)), "k_b": init(ks[3], (D,)),
        "v_w": init(ks[4], (D, D)), "v_b": init(ks[5], (D,)),
        "d_w": init(ks[6], (D, D)), "d_b": init(ks[7], (D,)),
    }
    x = jax.random.normal(ks[8], (B, T, D), dtype=jnp.float32)

    out = phi_mha_forward(x, params, num_heads=num_heads, rope_dims=rope_dims)
    out = jax.block_until_ready(out)

    ref = phi_mha_reference(x, params, num_heads=num_heads, rope_dims=rope_dims)
    assert out.shape == (B, T, D)
    # bf16 MXU operands + approximate reciprocal -> relaxed tolerance vs f32 reference.
    assert jnp.allclose(out, ref, rtol=2e-2, atol=2e-2), "mismatch vs pure-JAX reference"

    print("KERNEL_OK")
</pallas_src>

<mosaic_0001>
module attributes {stable_mosaic.version = 11 : i64} {
  func.func @_phi_mha_kernel(%arg0: i32, %arg1: memref<1x8x128xbf16, #tpu.memory_space<vmem>>, %arg2: memref<128x384xbf16, #tpu.memory_space<vmem>>, %arg3: memref<128x128xbf16, #tpu.memory_space<vmem>>, %arg4: memref<1x384xf32, #tpu.memory_space<vmem>>, %arg5: memref<1x128xf32, #tpu.memory_space<vmem>>, %arg6: memref<8x128xf32, #tpu.memory_space<vmem>>, %arg7: memref<8x128xf32, #tpu.memory_space<vmem>>, %arg8: memref<8x128xf32, #tpu.memory_space<vmem>>, %arg9: memref<1x8x128xf32, #tpu.memory_space<vmem>>, %arg10: memref<8x128xf32, #tpu.memory_space<vmem>>) attributes {dimension_semantics = [#tpu.dimension_semantics<parallel>], iteration_bounds = array<i64: 2>, scalar_prefetch = 0 : i64, scratch_operands = 1 : i64, tpu.core_type = #tpu.core_type<tc>, window_params = [{transform_indices = @transform_0, window_bounds = array<i64: 1, 8, 128>}, {pipeline_mode = #tpu.pipeline_mode<synchronous>, transform_indices = @transform_1, window_bounds = array<i64: 128, 384>}, {pipeline_mode = #tpu.pipeline_mode<synchronous>, transform_indices = @transform_2, window_bounds = array<i64: 128, 128>}, {pipeline_mode = #tpu.pipeline_mode<synchronous>, transform_indices = @transform_3, window_bounds = array<i64: 1, 384>}, {pipeline_mode = #tpu.pipeline_mode<synchronous>, transform_indices = @transform_4, window_bounds = array<i64: 1, 128>}, {pipeline_mode = #tpu.pipeline_mode<synchronous>, transform_indices = @transform_5, window_bounds = array<i64: 8, 128>}, {pipeline_mode = #tpu.pipeline_mode<synchronous>, transform_indices = @transform_6, window_bounds = array<i64: 8, 128>}, {pipeline_mode = #tpu.pipeline_mode<synchronous>, transform_indices = @transform_7, window_bounds = array<i64: 8, 128>}, {transform_indices = @transform_8, window_bounds = array<i64: 1, 8, 128>}]} {
    %c0 = arith.constant 0 : index
    %c0_0 = arith.constant 0 : index
    %c0_1 = arith.constant 0 : index
    %0 = vector.load %arg1[%c0, %c0_0, %c0_1] : memref<1x8x128xbf16, #tpu.memory_space<vmem>>, vector<1x8x128xbf16>
    %1 = vector.shape_cast %0 : vector<1x8x128xbf16> to vector<8x128xbf16>
    %c0_2 = arith.constant 0 : index
    %c0_3 = arith.constant 0 : index
    %2 = vector.load %arg2[%c0_2, %c0_3] : memref<128x384xbf16, #tpu.memory_space<vmem>>, vector<128x384xbf16>
    %cst = arith.constant dense<0.000000e+00> : vector<8x384xf32>
    %3 = tpu.matmul %1, %2, %cst {dimension_numbers = #tpu.dot_dimension_numbers<[1], [0], [0], [1], [0, 0, 1, 1], [], []>} : vector<8x128xbf16>, vector<128x384xbf16>, vector<8x384xf32> -> vector<8x384xf32>
    %c0_4 = arith.constant 0 : index
    %c0_5 = arith.constant 0 : index
    %4 = vector.load %arg4[%c0_4, %c0_5] : memref<1x384xf32, #tpu.memory_space<vmem>>, vector<1x384xf32>
    %5 = vector.broadcast %4 : vector<1x384xf32> to vector<8x384xf32>
    %6 = arith.addf %3, %5 : vector<8x384xf32>
    %7 = vector.extract_strided_slice %6 {offsets = [0, 0], sizes = [8, 128], strides = [1, 1]} : vector<8x384xf32> to vector<8x128xf32>
    %8 = vector.extract_strided_slice %6 {offsets = [0, 128], sizes = [8, 128], strides = [1, 1]} : vector<8x384xf32> to vector<8x128xf32>
    %9 = vector.extract_strided_slice %6 {offsets = [0, 256], sizes = [8, 128], strides = [1, 1]} : vector<8x384xf32> to vector<8x128xf32>
    %c0_6 = arith.constant 0 : index
    %c0_7 = arith.constant 0 : index
    %10 = vector.load %arg6[%c0_6, %c0_7] : memref<8x128xf32, #tpu.memory_space<vmem>>, vector<8x128xf32>
    %c0_8 = arith.constant 0 : index
    %c0_9 = arith.constant 0 : index
    %11 = vector.load %arg7[%c0_8, %c0_9] : memref<8x128xf32, #tpu.memory_space<vmem>>, vector<8x128xf32>
    %c0_10 = arith.constant 0 : index
    %c0_11 = arith.constant 0 : index
    %12 = vector.load %arg8[%c0_10, %c0_11] : memref<8x128xf32, #tpu.memory_space<vmem>>, vector<8x128xf32>
    %c120_i32 = arith.constant 120 : i32
    %13 = tpu.dynamic_rotate %7 by %c120_i32 dim 1 : vector<8x128xf32>, i32 -> vector<8x128xf32>
    %c8_i32 = arith.constant 8 : i32
    %14 = tpu.dynamic_rotate %7 by %c8_i32 dim 1 : vector<8x128xf32>, i32 -> vector<8x128xf32>
    %15 = arith.mulf %7, %10 : vector<8x128xf32>
    %16 = arith.mulf %13, %11 : vector<8x128xf32>
    %17 = arith.addf %15, %16 : vector<8x128xf32>
    %18 = arith.mulf %14, %12 : vector<8x128xf32>
    %19 = arith.addf %17, %18 : vector<8x128xf32>
    %20 = arith.truncf %19 : vector<8x128xf32> to vector<8x128xbf16>
    %c120_i32_12 = arith.constant 120 : i32
    %21 = tpu.dynamic_rotate %8 by %c120_i32_12 dim 1 : vector<8x128xf32>, i32 -> vector<8x128xf32>
    %c8_i32_13 = arith.constant 8 : i32
    %22 = tpu.dynamic_rotate %8 by %c8_i32_13 dim 1 : vector<8x128xf32>, i32 -> vector<8x128xf32>
    %23 = arith.mulf %8, %10 : vector<8x128xf32>
    %24 = arith.mulf %21, %11 : vector<8x128xf32>
    %25 = arith.addf %23, %24 : vector<8x128xf32>
    %26 = arith.mulf %22, %12 : vector<8x128xf32>
    %27 = arith.addf %25, %26 : vector<8x128xf32>
    %28 = arith.truncf %27 : vector<8x128xf32> to vector<8x128xbf16>
    %29 = arith.truncf %9 : vector<8x128xf32> to vector<8x128xbf16>
    %30 = vector.extract_strided_slice %20 {offsets = [0, 0], sizes = [8, 32], strides = [1, 1]} : vector<8x128xbf16> to vector<8x32xbf16>
    %31 = vector.extract_strided_slice %28 {offsets = [0, 0], sizes = [8, 32], strides = [1, 1]} : vector<8x128xbf16> to vector<8x32xbf16>
    %32 = vector.extract_strided_slice %29 {offsets = [0, 0], sizes = [8, 32], strides = [1, 1]} : vector<8x128xbf16> to vector<8x32xbf16>
    %cst_14 = arith.constant dense<0.000000e+00> : vector<8x8xf32>
    %33 = tpu.matmul %30, %31, %cst_14 {dimension_numbers = #tpu.dot_dimension_numbers<[1], [1], [0], [0], [0, 0, 1, 0], [], []>} : vector<8x32xbf16>, vector<8x32xbf16>, vector<8x8xf32> -> vector<8x8xf32>
    %cst_15 = arith.constant dense<0xFF800000> : vector<8xf32>
    %34 = vector.multi_reduction <maximumf>, %33, %cst_15 [1] : vector<8x8xf32> to vector<8xf32>
    %35 = vector.shape_cast %34 : vector<8xf32> to vector<8x1xf32>
    %36 = vector.broadcast %35 : vector<8x1xf32> to vector<8x8xf32>
    %37 = arith.subf %33, %36 : vector<8x8xf32>
    %38 = math.exp %37 : vector<8x8xf32>
    %cst_16 = arith.constant dense<0.000000e+00> : vector<8xf32>
    %39 = vector.multi_reduction <add>, %38, %cst_16 [1] : vector<8x8xf32> to vector<8xf32>
    %40 = vector.shape_cast %39 : vector<8xf32> to vector<8x1xf32>
    %41 = arith.truncf %38 : vector<8x8xf32> to vector<8x8xbf16>
    %cst_17 = arith.constant dense<0.000000e+00> : vector<8x32xf32>
    %42 = tpu.matmul %41, %32, %cst_17 {dimension_numbers = #tpu.dot_dimension_numbers<[1], [0], [0], [1], [0, 0, 1, 1], [], []>} : vector<8x8xbf16>, vector<8x32xbf16>, vector<8x32xf32> -> vector<8x32xf32>
    %43 = tpu.reciprocal %40 {approx = true} : vector<8x1xf32> -> vector<8x1xf32>
    %44 = vector.broadcast %43 : vector<8x1xf32> to vector<8x32xf32>
    %45 = arith.mulf %42, %44 : vector<8x32xf32>
    %c0_18 = arith.constant 0 : index
    %c0_19 = arith.constant 0 : index
    %46 = vector.load %arg10[%c0_18, %c0_19] : memref<8x128xf32, #tpu.memory_space<vmem>>, vector<8x32xf32>
    tpu.vector_store %arg10[%c0_18, %c0_19], %45 {strides = array<i32>} : memref<8x128xf32, #tpu.memory_space<vmem>>, vector<8x32xf32>,
    %47 = vector.extract_strided_slice %20 {offsets = [0, 32], sizes = [8, 32], strides = [1, 1]} : vector<8x128xbf16> to vector<8x32xbf16>
    %48 = vector.extract_strided_slice %28 {offsets = [0, 32], sizes = [8, 32], strides = [1, 1]} : vector<8x128xbf16> to vector<8x32xbf16>
    %49 = vector.extract_strided_slice %29 {offsets = [0, 32], sizes = [8, 32], strides = [1, 1]} : vector<8x128xbf16> to vector<8x32xbf16>
    %cst_20 = arith.constant dense<0.000000e+00> : vector<8x8xf32>
    %50 = tpu.matmul %47, %48, %cst_20 {dimension_numbers = #tpu.dot_dimension_numbers<[1], [1], [0], [0], [0, 0, 1, 0], [], []>} : vector<8x32xbf16>, vector<8x32xbf16>, vector<8x8xf32> -> vector<8x8xf32>
    %cst_21 = arith.constant dense<0xFF800000> : vector<8xf32>
    %51 = vector.multi_reduction <maximumf>, %50, %cst_21 [1] : vector<8x8xf32> to vector<8xf32>
    %52 = vector.shape_cast %51 : vector<8xf32> to vector<8x1xf32>
    %53 = vector.broadcast %52 : vector<8x1xf32> to vector<8x8xf32>
    %54 = arith.subf %50, %53 : vector<8x8xf32>
    %55 = math.exp %54 : vector<8x8xf32>
    %cst_22 = arith.constant dense<0.000000e+00> : vector<8xf32>
    %56 = vector.multi_reduction <add>, %55, %cst_22 [1] : vector<8x8xf32> to vector<8xf32>
    %57 = vector.shape_cast %56 : vector<8xf32> to vector<8x1xf32>
    %58 = arith.truncf %55 : vector<8x8xf32> to vector<8x8xbf16>
    %cst_23 = arith.constant dense<0.000000e+00> : vector<8x32xf32>
    %59 = tpu.matmul %58, %49, %cst_23 {dimension_numbers = #tpu.dot_dimension_numbers<[1], [0], [0], [1], [0, 0, 1, 1], [], []>} : vector<8x8xbf16>, vector<8x32xbf16>, vector<8x32xf32> -> vector<8x32xf32>
    %60 = tpu.reciprocal %57 {approx = true} : vector<8x1xf32> -> vector<8x1xf32>
    %61 = vector.broadcast %60 : vector<8x1xf32> to vector<8x32xf32>
    %62 = arith.mulf %59, %61 : vector<8x32xf32>
    %c0_24 = arith.constant 0 : index
    %c32 = arith.constant 32 : index
    %63 = vector.load %arg10[%c0_24, %c32] : memref<8x128xf32, #tpu.memory_space<vmem>>, vector<8x32xf32>
    tpu.vector_store %arg10[%c0_24, %c32], %62 {strides = array<i32>} : memref<8x128xf32, #tpu.memory_space<vmem>>, vector<8x32xf32>,
    %64 = vector.extract_strided_slice %20 {offsets = [0, 64], sizes = [8, 32], strides = [1, 1]} : vector<8x128xbf16> to vector<8x32xbf16>
    %65 = vector.extract_strided_slice %28 {offsets = [0, 64], sizes = [8, 32], strides = [1, 1]} : vector<8x128xbf16> to vector<8x32xbf16>
    %66 = vector.extract_strided_slice %29 {offsets = [0, 64], sizes = [8, 32], strides = [1, 1]} : vector<8x128xbf16> to vector<8x32xbf16>
    %cst_25 = arith.constant dense<0.000000e+00> : vector<8x8xf32>
    %67 = tpu.matmul %64, %65, %cst_25 {dimension_numbers = #tpu.dot_dimension_numbers<[1], [1], [0], [0], [0, 0, 1, 0], [], []>} : vector<8x32xbf16>, vector<8x32xbf16>, vector<8x8xf32> -> vector<8x8xf32>
    %cst_26 = arith.constant dense<0xFF800000> : vector<8xf32>
    %68 = vector.multi_reduction <maximumf>, %67, %cst_26 [1] : vector<8x8xf32> to vector<8xf32>
    %69 = vector.shape_cast %68 : vector<8xf32> to vector<8x1xf32>
    %70 = vector.broadcast %69 : vector<8x1xf32> to vector<8x8xf32>
    %71 = arith.subf %67, %70 : vector<8x8xf32>
    %72 = math.exp %71 : vector<8x8xf32>
    %cst_27 = arith.constant dense<0.000000e+00> : vector<8xf32>
    %73 = vector.multi_reduction <add>, %72, %cst_27 [1] : vector<8x8xf32> to vector<8xf32>
    %74 = vector.shape_cast %73 : vector<8xf32> to vector<8x1xf32>
    %75 = arith.truncf %72 : vector<8x8xf32> to vector<8x8xbf16>
    %cst_28 = arith.constant dense<0.000000e+00> : vector<8x32xf32>
    %76 = tpu.matmul %75, %66, %cst_28 {dimension_numbers = #tpu.dot_dimension_numbers<[1], [0], [0], [1], [0, 0, 1, 1], [], []>} : vector<8x8xbf16>, vector<8x32xbf16>, vector<8x32xf32> -> vector<8x32xf32>
    %77 = tpu.reciprocal %74 {approx = true} : vector<8x1xf32> -> vector<8x1xf32>
    %78 = vector.broadcast %77 : vector<8x1xf32> to vector<8x32xf32>
    %79 = arith.mulf %76, %78 : vector<8x32xf32>
    %c0_29 = arith.constant 0 : index
    %c64 = arith.constant 64 : index
    %80 = vector.load %arg10[%c0_29, %c64] : memref<8x128xf32, #tpu.memory_space<vmem>>, vector<8x32xf32>
    tpu.vector_store %arg10[%c0_29, %c64], %79 {strides = array<i32>} : memref<8x128xf32, #tpu.memory_space<vmem>>, vector<8x32xf32>,
    %81 = vector.extract_strided_slice %20 {offsets = [0, 96], sizes = [8, 32], strides = [1, 1]} : vector<8x128xbf16> to vector<8x32xbf16>
    %82 = vector.extract_strided_slice %28 {offsets = [0, 96], sizes = [8, 32], strides = [1, 1]} : vector<8x128xbf16> to vector<8x32xbf16>
    %83 = vector.extract_strided_slice %29 {offsets = [0, 96], sizes = [8, 32], strides = [1, 1]} : vector<8x128xbf16> to vector<8x32xbf16>
    %cst_30 = arith.constant dense<0.000000e+00> : vector<8x8xf32>
    %84 = tpu.matmul %81, %82, %cst_30 {dimension_numbers = #tpu.dot_dimension_numbers<[1], [1], [0], [0], [0, 0, 1, 0], [], []>} : vector<8x32xbf16>, vector<8x32xbf16>, vector<8x8xf32> -> vector<8x8xf32>
    %cst_31 = arith.constant dense<0xFF800000> : vector<8xf32>
    %85 = vector.multi_reduction <maximumf>, %84, %cst_31 [1] : vector<8x8xf32> to vector<8xf32>
    %86 = vector.shape_cast %85 : vector<8xf32> to vector<8x1xf32>
    %87 = vector.broadcast %86 : vector<8x1xf32> to vector<8x8xf32>
    %88 = arith.subf %84, %87 : vector<8x8xf32>
    %89 = math.exp %88 : vector<8x8xf32>
    %cst_32 = arith.constant dense<0.000000e+00> : vector<8xf32>
    %90 = vector.multi_reduction <add>, %89, %cst_32 [1] : vector<8x8xf32> to vector<8xf32>
    %91 = vector.shape_cast %90 : vector<8xf32> to vector<8x1xf32>
    %92 = arith.truncf %89 : vector<8x8xf32> to vector<8x8xbf16>
    %cst_33 = arith.constant dense<0.000000e+00> : vector<8x32xf32>
    %93 = tpu.matmul %92, %83, %cst_33 {dimension_numbers = #tpu.dot_dimension_numbers<[1], [0], [0], [1], [0, 0, 1, 1], [], []>} : vector<8x8xbf16>, vector<8x32xbf16>, vector<8x32xf32> -> vector<8x32xf32>
    %94 = tpu.reciprocal %91 {approx = true} : vector<8x1xf32> -> vector<8x1xf32>
    %95 = vector.broadcast %94 : vector<8x1xf32> to vector<8x32xf32>
    %96 = arith.mulf %93, %95 : vector<8x32xf32>
    %c0_34 = arith.constant 0 : index
    %c96 = arith.constant 96 : index
    %97 = vector.load %arg10[%c0_34, %c96] : memref<8x128xf32, #tpu.memory_space<vmem>>, vector<8x32xf32>
    tpu.vector_store %arg10[%c0_34, %c96], %96 {strides = array<i32>} : memref<8x128xf32, #tpu.memory_space<vmem>>, vector<8x32xf32>,
    %c0_35 = arith.constant 0 : index
    %c0_36 = arith.constant 0 : index
    %98 = vector.load %arg10[%c0_35, %c0_36] : memref<8x128xf32, #tpu.memory_space<vmem>>, vector<8x128xf32>
    %99 = arith.truncf %98 : vector<8x128xf32> to vector<8x128xbf16>
    %c0_37 = arith.constant 0 : index
    %c0_38 = arith.constant 0 : index
    %100 = vector.load %arg3[%c0_37, %c0_38] : memref<128x128xbf16, #tpu.memory_space<vmem>>, vector<128x128xbf16>
    %cst_39 = arith.constant dense<0.000000e+00> : vector<8x128xf32>
    %101 = tpu.matmul %99, %100, %cst_39 {dimension_numbers = #tpu.dot_dimension_numbers<[1], [0], [0], [1], [0, 0, 1, 1], [], []>} : vector<8x128xbf16>, vector<128x128xbf16>, vector<8x128xf32> -> vector<8x128xf32>
    %c0_40 = arith.constant 0 : index
    %c0_41 = arith.constant 0 : index
    %102 = vector.load %arg5[%c0_40, %c0_41] : memref<1x128xf32, #tpu.memory_space<vmem>>, vector<1x128xf32>
    %103 = vector.broadcast %102 : vector<1x128xf32> to vector<8x128xf32>
    %104 = arith.addf %101, %103 : vector<8x128xf32>
    %c0_42 = arith.constant 0 : index
    %c0_43 = arith.constant 0 : index
    %c0_44 = arith.constant 0 : index
    %105 = vector.load %arg9[%c0_42, %c0_43, %c0_44] : memref<1x8x128xf32, #tpu.memory_space<vmem>>, vector<1x8x128xf32>
    %106 = vector.shape_cast %105 : vector<1x8x128xf32> to vector<8x128xf32>
    %107 = vector.shape_cast %104 : vector<8x128xf32> to vector<1x8x128xf32>
    tpu.vector_store %arg9[%c0_42, %c0_43, %c0_44], %107 {strides = array<i32>} : memref<1x8x128xf32, #tpu.memory_space<vmem>>, vector<1x8x128xf32>,
    return
  }
  func.func @transform_0(%arg0: i32) -> (i32, i32, i32) {
    %c0_i32 = arith.constant 0 : i32
    %c0_i32_0 = arith.constant 0 : i32
    %c0_i32_1 = arith.constant 0 : i32
    return %arg0, %c0_i32, %c0_i32_0 : i32, i32, i32
  }
  func.func @transform_1(%arg0: i32) -> (i32, i32) {
    %c0_i32 = arith.constant 0 : i32
    %c0_i32_0 = arith.constant 0 : i32
    %c0_i32_1 = arith.constant 0 : i32
    return %c0_i32, %c0_i32_0 : i32, i32
  }
  func.func @transform_2(%arg0: i32) -> (i32, i32) {
    %c0_i32 = arith.constant 0 : i32
    %c0_i32_0 = arith.constant 0 : i32
    %c0_i32_1 = arith.constant 0 : i32
    return %c0_i32, %c0_i32_0 : i32, i32
  }
  func.func @transform_3(%arg0: i32) -> (i32, i32) {
    %c0_i32 = arith.constant 0 : i32
    %c0_i32_0 = arith.constant 0 : i32
    %c0_i32_1 = arith.constant 0 : i32
    return %c0_i32, %c0_i32_0 : i32, i32
  }
  func.func @transform_4(%arg0: i32) -> (i32, i32) {
    %c0_i32 = arith.constant 0 : i32
    %c0_i32_0 = arith.constant 0 : i32
    %c0_i32_1 = arith.constant 0 : i32
    return %c0_i32, %c0_i32_0 : i32, i32
  }
  func.func @transform_5(%arg0: i32) -> (i32, i32) {
    %c0_i32 = arith.constant 0 : i32
    %c0_i32_0 = arith.constant 0 : i32
    %c0_i32_1 = arith.constant 0 : i32
    return %c0_i32, %c0_i32_0 : i32, i32
  }
  func.func @transform_6(%arg0: i32) -> (i32, i32) {
    %c0_i32 = arith.constant 0 : i32
    %c0_i32_0 = arith.constant 0 : i32
    %c0_i32_1 = arith.constant 0 : i32
    return %c0_i32, %c0_i32_0 : i32, i32
  }
  func.func @transform_7(%arg0: i32) -> (i32, i32) {
    %c0_i32 = arith.constant 0 : i32
    %c0_i32_0 = arith.constant 0 : i32
    %c0_i32_1 = arith.constant 0 : i32
    return %c0_i32, %c0_i32_0 : i32, i32
  }
  func.func @transform_8(%arg0: i32) -> (i32, i32, i32) {
    %c0_i32 = arith.constant 0 : i32
    %c0_i32_0 = arith.constant 0 : i32
    %c0_i32_1 = arith.constant 0 : i32
    return %arg0, %c0_i32, %c0_i32_0 : i32, i32, i32
  }
}

</mosaic_0001>

<llo_original>
// kernel: tpu_custom_call.1
$region0: #{tpu_custom_call.1}
  #allocation0 [shape = 'u32[]', space=smem, size = 0x4, offset = 0x4, fixed_abs, tag = 'smem constant byte address 0x4 - core index']
  #allocation1 [shape = 'u32[144,128]{1,0:T(1,128)}', space=vmem, size = 0x12000, scoped, tag = 'internal scratch']
  #allocation2 [shape = 'f32[8,128]{1,0:T(8,128)}', space=vmem, size = 0x1000, scoped, tag = 'scratch operand']
  %s0 = inlined_call_operand.hbm [shape: bf16[2,8,128], index: 0, kind: input, shape index: {}]
  %s1 = inlined_call_operand.hbm [shape: bf16[128,384], index: 1, kind: input, shape index: {}]
  %s2 = inlined_call_operand.hbm [shape: bf16[128,128], index: 2, kind: input, shape index: {}]
  %s3 = inlined_call_operand.hbm [shape: f32[1,384], index: 3, kind: input, shape index: {}]
  %s4 = inlined_call_operand.hbm [shape: f32[1,128], index: 4, kind: input, shape index: {}]
  %s5 = inlined_call_operand.hbm [shape: f32[8,128], index: 5, kind: input, shape index: {}]
  %s6 = inlined_call_operand.hbm [shape: f32[8,128], index: 6, kind: input, shape index: {}]
  %s7 = inlined_call_operand.hbm [shape: f32[8,128], index: 7, kind: input, shape index: {}]
  %s8 = inlined_call_operand.hbm [shape: f32[2,8,128], index: 8, kind: output, shape index: {}]
  %s9 = sld [smem:[#allocation0]]
  $region97: #{tpu_custom_call.1} parent=0
    _
  %s11 = ssub.s32 1, %s9
  %s12 = scalar_select 0, %s11, %s9
  $region1: #{tpu_custom_call.1} parent=0
    #allocation3 [shape = 'u8[4096]{0}', space=vmem, size = 0x1000, scoped, tag = 'input window, operand 0']
    #allocation4 [shape = 's32[2]{0}', space=sflag, size = 0x8, scoped, tag = 'scoped memory for tpu_custom_call.1']
    #allocation5 [shape = 's32[2]{0}', space=sflag, size = 0x8, scoped, tag = 'scoped memory for tpu_custom_call.1']
    #allocation6 [shape = 'u8[98304]{0}', space=vmem, size = 0x18000, scoped, tag = 'input window, operand 1, single buffered']
    #allocation7 [shape = 's32[1]{0}', space=sflag, size = 0x4, scoped, tag = 'scoped memory for tpu_custom_call.1']
    #allocation8 [shape = 'u8[32768]{0}', space=vmem, size = 0x8000, scoped, tag = 'input window, operand 2, single buffered']
    #allocation9 [shape = 'u8[1536]{0}', space=vmem, size = 0x800, scoped, tag = 'input window, operand 3, single buffered']
    #allocation10 [shape = 's32[1]{0}', space=sflag, size = 0x4, scoped, tag = 'scoped memory for tpu_custom_call.1']
    #allocation11 [shape = 'u8[512]{0}', space=vmem, size = 0x400, scoped, tag = 'input window, operand 4, single buffered']
    #allocation12 [shape = 'u8[4096]{0}', space=vmem, size = 0x1000, scoped, tag = 'input window, operand 5, single buffered']
    #allocation13 [shape = 's32[1]{0}', space=sflag, size = 0x4, scoped, tag = 'scoped memory for tpu_custom_call.1']
    #allocation14 [shape = 'u8[4096]{0}', space=vmem, size = 0x1000, scoped, tag = 'input window, operand 6, single buffered']
    #allocation15 [shape = 'u8[4096]{0}', space=vmem, size = 0x1000, scoped, tag = 'input window, operand 7, single buffered']
    #allocation16 [shape = 's32[1]{0}', space=sflag, size = 0x4, scoped, tag = 'scoped memory for tpu_custom_call.1']
    #allocation17 [shape = 'u8[8192]{0}', space=vmem, size = 0x2000, scoped, tag = 'output window, operand 0']
    %13 = vsyncpa [#allocation4], 0
    %s14 = scalar_lea.sflag [#allocation4], 1
    %15 = vsyncpa %s14, 0
    %16 = vsyncpa [#allocation7], 0
    %17 = vsyncpa [#allocation10], 0
    %18 = vsyncpa [#allocation13], 0
    %19 = vsyncpa [#allocation16], 0
    %20 = vsyncpa [#allocation5], 0
    %s21 = scalar_lea.sflag [#allocation5], 1
    %22 = vsyncpa %s21, 0
    loop: start=0, step=1, limit=4
    $region2: #{tpu_custom_call.1} parent=1 // loop_pre_header
      _
    $region3: #{tpu_custom_call.1} parent=1 // loop_header
      %s24 = sphi 0, %s28
      %p25 = scmp.ge.s32.totalorder %s24, 4
      %s34 = sphi 0, %s36
      %s37 = sphi 0, %s34
      %s38 = sphi 0, %s37
      %s54 = sphi 0, %s38
      %s58 = sphi 0, %s58
      %s60 = sphi 0, %s58
      %s61 = sphi 0, %s60
      %s75 = sphi 0, %s61
      %s79 = sphi 0, %s79
      %s81 = sphi 0, %s79
      %s82 = sphi 0, %s81
      %s96 = sphi 0, %s82
      %s100 = sphi 0, %s100
      %s102 = sphi 0, %s100
      %s103 = sphi 0, %s102
      %s117 = sphi 0, %s103
      %s121 = sphi 0, %s121
      %s123 = sphi 0, %s121
      %s124 = sphi 0, %s123
      %s138 = sphi 0, %s124
      %s142 = sphi 0, %s142
      %s144 = sphi 0, %s142
      %s145 = sphi 0, %s144
      %s159 = sphi 0, %s145
      %s163 = sphi 0, %s163
      %s165 = sphi 0, %s163
      %s166 = sphi 0, %s165
      %s180 = sphi 0, %s166
      %s184 = sphi 0, %s184
      %s186 = sphi 0, %s184
      %s187 = sphi 0, %s186
      %s201 = sphi 0, %s187
      %s207 = sphi 0, %s209
      %s210 = sphi 0, %s207
      %s211 = sphi 0, %s210
      %s227 = sphi 0, %s211
    $region4: #{tpu_custom_call.1} parent=1 // loop_header_branch
      %27 = sbr.rel (%p25) target = $region8
    $region5: #{tpu_custom_call.1} parent=1 // loop_body
      %s29 = ssub.s32 %s24, 1
      %s30 = ssub.s32 %s24, 2
      %s31 = sadd.s32 %s24, 1
      %s32 = ssub.s32 %s24, %s31
      %p33 = scmp.eq.s32.totalorder %s32, 0
      %s35 = sadd.s32 %s34, 1
      %s36 = scalar_select %p33, %s34, %s35
      %p39 = pneg %p33
      %p40 = scmp.eq.s32.totalorder %s24, 1
      %p41 = por %p39, %p40
      %p42 = scmp.ne.s32.totalorder %s34, %s37
      %p43 = scmp.eq.s32.totalorder %s24, 0
      %p44 = por %p42, %p43
      %p45 = scmp.ne.s32.totalorder %s34, %s37
      %p46 = scmp.eq.s32.totalorder %s29, 1
      %p47 = por %p45, %p46
      %p48 = scmp.ne.s32.totalorder %s37, %s38
      %p49 = scmp.eq.s32.totalorder %s29, 0
      %p50 = por %p48, %p49
      %p51 = scmp.ne.s32.totalorder %s37, %s38
      %p52 = scmp.eq.s32.totalorder %s30, 1
      %p53 = por %p51, %p52
      %p55 = scmp.ne.s32.totalorder %s38, %s54
      %p56 = scmp.eq.s32.totalorder %s30, 0
      %p57 = por %p55, %p56
      %s59 = sadd.s32 %s58, 1
      %p62 = scmp.eq.s32.totalorder %s24, 1
      %p63 = scmp.ne.s32.totalorder %s58, %s60
      %p64 = scmp.eq.s32.totalorder %s24, 0
      %p65 = por %p63, %p64
      %p66 = scmp.ne.s32.totalorder %s58, %s60
      %p67 = scmp.eq.s32.totalorder %s29, 1
      %p68 = por %p66, %p67
      %p69 = scmp.ne.s32.totalorder %s60, %s61
      %p70 = scmp.eq.s32.totalorder %s29, 0
      %p71 = por %p69, %p70
      %p72 = scmp.ne.s32.totalorder %s60, %s61
      %p73 = scmp.eq.s32.totalorder %s30, 1
      %p74 = por %p72, %p73
      %p76 = scmp.ne.s32.totalorder %s61, %s75
      %p77 = scmp.eq.s32.totalorder %s30, 0
      %p78 = por %p76, %p77
      %s80 = sadd.s32 %s79, 1
      %p83 = scmp.eq.s32.totalorder %s24, 1
      %p84 = scmp.ne.s32.totalorder %s79, %s81
      %p85 = scmp.eq.s32.totalorder %s24, 0
      %p86 = por %p84, %p85
      %p87 = scmp.ne.s32.totalorder %s79, %s81
      %p88 = scmp.eq.s32.totalorder %s29, 1
      %p89 = por %p87, %p88
      %p90 = scmp.ne.s32.totalorder %s81, %s82
      %p91 = scmp.eq.s32.totalorder %s29, 0
      %p92 = por %p90, %p91
      %p93 = scmp.ne.s32.totalorder %s81, %s82
      %p94 = scmp.eq.s32.totalorder %s30, 1
      %p95 = por %p93, %p94
      %p97 = scmp.ne.s32.totalorder %s82, %s96
      %p98 = scmp.eq.s32.totalorder %s30, 0
      %p99 = por %p97, %p98
      %s101 = sadd.s32 %s100, 1
      %p104 = scmp.eq.s32.totalorder %s24, 1
      %p105 = scmp.ne.s32.totalorder %s100, %s102
      %p106 = scmp.eq.s32.totalorder %s24, 0
      %p107 = por %p105, %p106
      %p108 = scmp.ne.s32.totalorder %s100, %s102
      %p109 = scmp.eq.s32.totalorder %s29, 1
      %p110 = por %p108, %p109
      %p111 = scmp.ne.s32.totalorder %s102, %s103
      %p112 = scmp.eq.s32.totalorder %s29, 0
      %p113 = por %p111, %p112
      %p114 = scmp.ne.s32.totalorder %s102, %s103
      %p115 = scmp.eq.s32.totalorder %s30, 1
      %p116 = por %p114, %p115
      %p118 = scmp.ne.s32.totalorder %s103, %s117
      %p119 = scmp.eq.s32.totalorder %s30, 0
      %p120 = por %p118, %p119
      %s122 = sadd.s32 %s121, 1
      %p125 = scmp.eq.s32.totalorder %s24, 1
      %p126 = scmp.ne.s32.totalorder %s121, %s123
      %p127 = scmp.eq.s32.totalorder %s24, 0
      %p128 = por %p126, %p127
      %p129 = scmp.ne.s32.totalorder %s121, %s123
      %p130 = scmp.eq.s32.totalorder %s29, 1
      %p131 = por %p129, %p130
      %p132 = scmp.ne.s32.totalorder %s123, %s124
      %p133 = scmp.eq.s32.totalorder %s29, 0
      %p134 = por %p132, %p133
      %p135 = scmp.ne.s32.totalorder %s123, %s124
      %p136 = scmp.eq.s32.totalorder %s30, 1
      %p137 = por %p135, %p136
      %p139 = scmp.ne.s32.totalorder %s124, %s138
      %p140 = scmp.eq.s32.totalorder %s30, 0
      %p141 = por %p139, %p140
      %s143 = sadd.s32 %s142, 1
      %p146 = scmp.eq.s32.totalorder %s24, 1
      %p147 = scmp.ne.s32.totalorder %s142, %s144
      %p148 = scmp.eq.s32.totalorder %s24, 0
      %p149 = por %p147, %p148
      %p150 = scmp.ne.s32.totalorder %s142, %s144
      %p151 = scmp.eq.s32.totalorder %s29, 1
      %p152 = por %p150, %p151
      %p153 = scmp.ne.s32.totalorder %s144, %s145
      %p154 = scmp.eq.s32.totalorder %s29, 0
      %p155 = por %p153, %p154
      %p156 = scmp.ne.s32.totalorder %s144, %s145
      %p157 = scmp.eq.s32.totalorder %s30, 1
      %p158 = por %p156, %p157
      %p160 = scmp.ne.s32.totalorder %s145, %s159
      %p161 = scmp.eq.s32.totalorder %s30, 0
      %p162 = por %p160, %p161
      %s164 = sadd.s32 %s163, 1
      %p167 = scmp.eq.s32.totalorder %s24, 1
      %p168 = scmp.ne.s32.totalorder %s163, %s165
      %p169 = scmp.eq.s32.totalorder %s24, 0
      %p170 = por %p168, %p169
      %p171 = scmp.ne.s32.totalorder %s163, %s165
      %p172 = scmp.eq.s32.totalorder %s29, 1
      %p173 = por %p171, %p172
      %p174 = scmp.ne.s32.totalorder %s165, %s166
      %p175 = scmp.eq.s32.totalorder %s29, 0
      %p176 = por %p174, %p175
      %p177 = scmp.ne.s32.totalorder %s165, %s166
      %p178 = scmp.eq.s32.totalorder %s30, 1
      %p179 = por %p177, %p178
      %p181 = scmp.ne.s32.totalorder %s166, %s180
      %p182 = scmp.eq.s32.totalorder %s30, 0
      %p183 = por %p181, %p182
      %s185 = sadd.s32 %s184, 1
      %p188 = scmp.eq.s32.totalorder %s24, 1
      %p189 = scmp.ne.s32.totalorder %s184, %s186
      %p190 = scmp.eq.s32.totalorder %s24, 0
      %p191 = por %p189, %p190
      %p192 = scmp.ne.s32.totalorder %s184, %s186
      %p193 = scmp.eq.s32.totalorder %s29, 1
      %p194 = por %p192, %p193
      %p195 = scmp.ne.s32.totalorder %s186, %s187
      %p196 = scmp.eq.s32.totalorder %s29, 0
      %p197 = por %p195, %p196
      %p198 = scmp.ne.s32.totalorder %s186, %s187
      %p199 = scmp.eq.s32.totalorder %s30, 1
      %p200 = por %p198, %p199
      %p202 = scmp.ne.s32.totalorder %s187, %s201
      %p203 = scmp.eq.s32.totalorder %s30, 0
      %p204 = por %p202, %p203
      %s205 = ssub.s32 %s24, %s31
      %p206 = scmp.eq.s32.totalorder %s205, 0
      %s208 = sadd.s32 %s207, 1
      %s209 = scalar_select %p206, %s207, %s208
      %p212 = pneg %p206
      %p213 = scmp.eq.s32.totalorder %s24, 1
      %p214 = por %p212, %p213
      %p215 = scmp.ne.s32.totalorder %s207, %s210
      %p216 = scmp.eq.s32.totalorder %s24, 0
      %p217 = por %p215, %p216
      %p218 = scmp.ne.s32.totalorder %s207, %s210
      %p219 = scmp.eq.s32.totalorder %s29, 1
      %p220 = por %p218, %p219
      %p221 = scmp.ne.s32.totalorder %s210, %s211
      %p222 = scmp.eq.s32.totalorder %s29, 0
      %p223 = por %p221, %p222
      %p224 = scmp.ne.s32.totalorder %s210, %s211
      %p225 = scmp.eq.s32.totalorder %s30, 1
      %p226 = por %p224, %p225
      %p228 = scmp.ne.s32.totalorder %s211, %s227
      %p229 = scmp.eq.s32.totalorder %s30, 0
      %p230 = por %p228, %p229
      %p231 = scmp.le.s32.totalorder 1, %s24
      %p232 = scmp.lt.s32.totalorder %s24, 3
      %p233 = pnand %p231, %p232
      %p234 = pneg %p233
      // Predicated region
      $region9: #{tpu_custom_call.1} parent=5 // pred_check
        _
      $region10: #{tpu_custom_call.1} parent=5 // pred_check_branch
        %236 = sbr.rel (%p233) target = $region12
      $region11: #{tpu_custom_call.1} parent=5 // pred_region
        %s237 = ssub.s32 %s24, 1
        // Predicated region
        $region13: #{tpu_custom_call.1} parent=11 // pred_check
          %p238 = pneg %p71
        $region14: #{tpu_custom_call.1} parent=11 // pred_check_branch
          %240 = sbr.rel (%p238) target = $region16
        $region15: #{tpu_custom_call.1} parent=11 // pred_region
          %s242 = ssub.s32 3072, 3072
          %243 = vsyncadd [#allocation7], %s242
          %s244 = sshll.u32 [#allocation6], 4
          %s245 = int_to_ptr.vmem [resolvable:$true] %s244
          %250 = dma.hbm_to_vmem [thread:$0]  %s1, 3072, %s245, [#allocation7], 192, 192, 12
        $region16: #{tpu_custom_call.1} parent=11 // pred_fallthru
          _
        // Predicated region
        $region17: #{tpu_custom_call.1} parent=11 // pred_check
          %p251 = pneg %p92
        $region18: #{tpu_custom_call.1} parent=11 // pred_check_branch
          %253 = sbr.rel (%p251) target = $region20
        $region19: #{tpu_custom_call.1} parent=11 // pred_region
          %s255 = ssub.s32 1024, 1024
          %256 = vsyncadd [#allocation7], %s255
          %s257 = sshll.u32 [#allocation8], 4
          %s258 = int_to_ptr.vmem [resolvable:$true] %s257
          %263 = dma.hbm_to_vmem [thread:$0]  %s2, 1024, %s258, [#allocation7], 64, 64, 4
        $region20: #{tpu_custom_call.1} parent=11 // pred_fallthru
          _
        // Predicated region
        $region21: #{tpu_custom_call.1} parent=11 // pred_check
          %p264 = pneg %p113
        $region22: #{tpu_custom_call.1} parent=11 // pred_check_branch
          %266 = sbr.rel (%p264) target = $region24
        $region23: #{tpu_custom_call.1} parent=11 // pred_region
          %s268 = ssub.s32 48, 48
          %269 = vsyncadd [#allocation10], %s268
          %s271 = sshll.u32 [#allocation9], 4
          %s272 = int_to_ptr.vmem [resolvable:$true] %s271
          %274 = dma.hbm_to_vmem [thread:$0]  %s3, 48, %s272, [#allocation10]
        $region24: #{tpu_custom_call.1} parent=11 // pred_fallthru
          _
        // Predicated region
        $region25: #{tpu_custom_call.1} parent=11 // pred_check
          %p275 = pneg %p134
        $region26: #{tpu_custom_call.1} parent=11 // pred_check_branch
          %277 = sbr.rel (%p275) target = $region28
        $region27: #{tpu_custom_call.1} parent=11 // pred_region
          %s279 = ssub.s32 16, 16
          %280 = vsyncadd [#allocation10], %s279
          %s282 = sshll.u32 [#allocation11], 4
          %s283 = int_to_ptr.vmem [resolvable:$true] %s282
          %285 = dma.hbm_to_vmem [thread:$0]  %s4, 16, %s283, [#allocation10]
        $region28: #{tpu_custom_call.1} parent=11 // pred_fallthru
          _
        // Predicated region
        $region29: #{tpu_custom_call.1} parent=11 // pred_check
          %p286 = pneg %p155
        $region30: #{tpu_custom_call.1} parent=11 // pred_check_branch
          %288 = sbr.rel (%p286) target = $region32
        $region31: #{tpu_custom_call.1} parent=11 // pred_region
          %s290 = ssub.s32 128, 128
          %291 = vsyncadd [#allocation13], %s290
          %s293 = sshll.u32 [#allocation12], 4
          %s294 = int_to_ptr.vmem [resolvable:$true] %s293
          %296 = dma.hbm_to_vmem [thread:$0]  %s5, 128, %s294, [#allocation13]
        $region32: #{tpu_custom_call.1} parent=11 // pred_fallthru
          _
        // Predicated region
        $region33: #{tpu_custom_call.1} parent=11 // pred_check
          %p297 = pneg %p176
        $region34: #{tpu_custom_call.1} parent=11 // pred_check_branch
          %299 = sbr.rel (%p297) target = $region36
        $region35: #{tpu_custom_call.1} parent=11 // pred_region
          %s301 = ssub.s32 128, 128
          %302 = vsyncadd [#allocation13], %s301
          %s304 = sshll.u32 [#allocation14], 4
          %s305 = int_to_ptr.vmem [resolvable:$true] %s304
          %307 = dma.hbm_to_vmem [thread:$0]  %s6, 128, %s305, [#allocation13]
        $region36: #{tpu_custom_call.1} parent=11 // pred_fallthru
          _
        // Predicated region
        $region37: #{tpu_custom_call.1} parent=11 // pred_check
          %p308 = pneg %p197
        $region38: #{tpu_custom_call.1} parent=11 // pred_check_branch
          %310 = sbr.rel (%p308) target = $region40
        $region39: #{tpu_custom_call.1} parent=11 // pred_region
          %s312 = ssub.s32 128, 128
          %313 = vsyncadd [#allocation16], %s312
          %s315 = sshll.u32 [#allocation15], 4
          %s316 = int_to_ptr.vmem [resolvable:$true] %s315
          %318 = dma.hbm_to_vmem [thread:$0]  %s7, 128, %s316, [#allocation16]
        $region40: #{tpu_custom_call.1} parent=11 // pred_fallthru
          _
      $region12: #{tpu_custom_call.1} parent=5 // pred_fallthru
        _
      %p319 = scmp.lt.s32.totalorder %s24, 2
      // Predicated region
      $region41: #{tpu_custom_call.1} parent=5 // pred_check
        %p320 = pneg %p319
      $region42: #{tpu_custom_call.1} parent=5 // pred_check_branch
        %322 = sbr.rel (%p320) target = $region44
      $region43: #{tpu_custom_call.1} parent=5 // pred_region
        // Predicated region
        $region45: #{tpu_custom_call.1} parent=43 // pred_check
          %p323 = pneg %p44
        $region46: #{tpu_custom_call.1} parent=43 // pred_check_branch
          %325 = sbr.rel (%p323) target = $region48
        $region47: #{tpu_custom_call.1} parent=43 // pred_region
          %s326 = sand.u32 %s34, 1
          %s327 = scalar_lea.sflag [#allocation4], %s326
          %s328 = sand.u32 %s34, 1
          %s329 = smul.addr %s328, 4
          %s330 = scalar_lea.vmem [#allocation3], %s329
          %s332 = ssub.s32 64, 64
          %333 = vsyncadd %s327, %s332
          %s334 = smul.addr %s24, 64
          %s335 = scalar_lea.hbm %s0, %s334
          %s337 = sshll.u32 %s330, 4
          %s338 = int_to_ptr.vmem [resolvable:$true] %s337
          %340 = dma.hbm_to_vmem [thread:$0]  %s335, 64, %s338, %s327
        $region48: #{tpu_custom_call.1} parent=43 // pred_fallthru
          _
      $region44: #{tpu_custom_call.1} parent=5 // pred_fallthru
        _
      %p341 = scmp.le.s32.totalorder 1, %s24
      %p342 = scmp.lt.s32.totalorder %s24, 3
      %p343 = pnand %p341, %p342
      %p344 = pneg %p343
      // Predicated region
      $region49: #{tpu_custom_call.1} parent=5 // pred_check
        _
      $region50: #{tpu_custom_call.1} parent=5 // pred_check_branch
        %346 = sbr.rel (%p343) target = $region52
      $region51: #{tpu_custom_call.1} parent=5 // pred_region
        %s347 = ssub.s32 %s24, 1
        %s348 = sand.u32 %s37, 1
        %s349 = scalar_lea.sflag [#allocation4], %s348
        %s350 = sand.u32 %s37, 1
        %s351 = smul.addr %s350, 4
        %s352 = scalar_lea.vmem [#allocation3], %s351
        // Predicated region
        $region53: #{tpu_custom_call.1} parent=51 // pred_check
          %p353 = pneg %p50
        $region54: #{tpu_custom_call.1} parent=51 // pred_check_branch
          %355 = sbr.rel (%p353) target = $region56
        $region55: #{tpu_custom_call.1} parent=51 // pred_region
          %356 = dma.done %s349, 64
        $region56: #{tpu_custom_call.1} parent=51 // pred_fallthru
          _
        // Predicated region
        $region57: #{tpu_custom_call.1} parent=51 // pred_check
          %p357 = pneg %p71
        $region58: #{tpu_custom_call.1} parent=51 // pred_check_branch
          %359 = sbr.rel (%p357) target = $region60
        $region59: #{tpu_custom_call.1} parent=51 // pred_region
          %360 = dma.done [#allocation7], 3072
        $region60: #{tpu_custom_call.1} parent=51 // pred_fallthru
          _
        // Predicated region
        $region61: #{tpu_custom_call.1} parent=51 // pred_check
          %p361 = pneg %p92
        $region62: #{tpu_custom_call.1} parent=51 // pred_check_branch
          %363 = sbr.rel (%p361) target = $region64
        $region63: #{tpu_custom_call.1} parent=51 // pred_region
          %364 = dma.done [#allocation7], 1024
        $region64: #{tpu_custom_call.1} parent=51 // pred_fallthru
          _
        // Predicated region
        $region65: #{tpu_custom_call.1} parent=51 // pred_check
          %p365 = pneg %p113
        $region66: #{tpu_custom_call.1} parent=51 // pred_check_branch
          %367 = sbr.rel (%p365) target = $region68
        $region67: #{tpu_custom_call.1} parent=51 // pred_region
          %368 = dma.done [#allocation10], 48
        $region68: #{tpu_custom_call.1} parent=51 // pred_fallthru
          _
        // Predicated region
        $region69: #{tpu_custom_call.1} parent=51 // pred_check
          %p369 = pneg %p134
        $region70: #{tpu_custom_call.1} parent=51 // pred_check_branch
          %371 = sbr.rel (%p369) target = $region72
        $region71: #{tpu_custom_call.1} parent=51 // pred_region
          %372 = dma.done [#allocation10], 16
        $region72: #{tpu_custom_call.1} parent=51 // pred_fallthru
          _
        // Predicated region
        $region73: #{tpu_custom_call.1} parent=51 // pred_check
          %p373 = pneg %p155
        $region74: #{tpu_custom_call.1} parent=51 // pred_check_branch
          %375 = sbr.rel (%p373) target = $region76
        $region75: #{tpu_custom_call.1} parent=51 // pred_region
          %376 = dma.done [#allocation13], 128
        $region76: #{tpu_custom_call.1} parent=51 // pred_fallthru
          _
        // Predicated region
        $region77: #{tpu_custom_call.1} parent=51 // pred_check
          %p377 = pneg %p176
        $region78: #{tpu_custom_call.1} parent=51 // pred_check_branch
          %379 = sbr.rel (%p377) target = $region80
        $region79: #{tpu_custom_call.1} parent=51 // pred_region
          %380 = dma.done [#allocation13], 128
        $region80: #{tpu_custom_call.1} parent=51 // pred_fallthru
          _
        // Predicated region
        $region81: #{tpu_custom_call.1} parent=51 // pred_check
          %p381 = pneg %p197
        $region82: #{tpu_custom_call.1} parent=51 // pred_check_branch
          %383 = sbr.rel (%p381) target = $region84
        $region83: #{tpu_custom_call.1} parent=51 // pred_region
          %384 = dma.done [#allocation16], 128
        $region84: #{tpu_custom_call.1} parent=51 // pred_fallthru
          _
        %s385 = sand.u32 %s37, 1
        %s386 = scalar_lea.sflag [#allocation4], %s385
        %s387 = sand.u32 %s37, 1
        %s388 = smul.addr %s387, 4
        %s389 = scalar_lea.vmem [#allocation3], %s388
        %p390 = pneg %p50
        %p391 = pneg %p47
        %p392 = pneg %p71
        %p393 = pneg %p68
        %p394 = pneg %p92
        %p395 = pneg %p89
        %p396 = pneg %p113
        %p397 = pneg %p110
        %p398 = pneg %p134
        %p399 = pneg %p131
        %p400 = pneg %p155
        %p401 = pneg %p152
        %p402 = pneg %p176
        %p403 = pneg %p173
        %p404 = pneg %p197
        %p405 = pneg %p194
        %p406 = pneg %p223
        %p407 = pneg %p220
        %s408 = sand.u32 %s210, 1
        %s409 = scalar_lea.sflag [#allocation5], %s408
        %s410 = sand.u32 %s210, 1
        %s411 = smul.addr %s410, 8
        %s412 = scalar_lea.vmem [#allocation17], %s411
        %v414 = vld [vmem:[%s352] sm:$0xf]
        %v415 = vld [vmem:[#allocation6] sm:$0xff]
        %v416 = vld [vmem:[#allocation6 + $0x8] sm:$0xf]
        %v417 = vld [vmem:[#allocation6 + $0xc] sm:$0xff]
        %v418 = vld [vmem:[#allocation6 + $0x14] sm:$0xf]
        %v419 = vld [vmem:[#allocation6 + $0x18] sm:$0xff]
        %v420 = vld [vmem:[#allocation6 + $0x20] sm:$0xf]
        %v421 = vld [vmem:[#allocation6 + $0x24] sm:$0xff]
        %v422 = vld [vmem:[#allocation6 + $0x2c] sm:$0xf]
        %v423 = vld [vmem:[#allocation6 + $0x30] sm:$0xff]
        %v424 = vld [vmem:[#allocation6 + $0x38] sm:$0xf]
        %v425 = vld [vmem:[#allocation6 + $0x3c] sm:$0xff]
        %v426 = vld [vmem:[#allocation6 + $0x44] sm:$0xf]
        %v427 = vld [vmem:[#allocation6 + $0x48] sm:$0xff]
        %v428 = vld [vmem:[#allocation6 + $0x50] sm:$0xf]
        %v429 = vld [vmem:[#allocation6 + $0x54] sm:$0xff]
        %v430 = vld [vmem:[#allocation6 + $0x5c] sm:$0xf]
        %v431 = vld [vmem:[#allocation6 + $0x60] sm:$0xff]
        %v432 = vld [vmem:[#allocation6 + $0x68] sm:$0xf]
        %v433 = vld [vmem:[#allocation6 + $0x6c] sm:$0xff]
        %v434 = vld [vmem:[#allocation6 + $0x74] sm:$0xf]
        %v435 = vld [vmem:[#allocation6 + $0x78] sm:$0xff]
        %v436 = vld [vmem:[#allocation6 + $0x80] sm:$0xf]
        %v437 = vld [vmem:[#allocation6 + $0x84] sm:$0xff]
        %v438 = vld [vmem:[#allocation6 + $0x8c] sm:$0xf]
        %v439 = vld [vmem:[#allocation6 + $0x90] sm:$0xff]
        %v440 = vld [vmem:[#allocation6 + $0x98] sm:$0xf]
        %v441 = vld [vmem:[#allocation6 + $0x9c] sm:$0xff]
        %v442 = vld [vmem:[#allocation6 + $0xa4] sm:$0xf]
        %v443 = vld [vmem:[#allocation6 + $0xa8] sm:$0xff]
        %v444 = vld [vmem:[#allocation6 + $0xb0] sm:$0xf]
        %v445 = vld [vmem:[#allocation6 + $0xb4] sm:$0xff]
        %v446 = vld [vmem:[#allocation6 + $0xbc] sm:$0xf]
        %v447 = vld [vmem:[#allocation9] sm:$0x7]
        %v449 = vlaneseq
        %v450 = vshrl.u32 %v449, 7
        %v451 = vsub.s32 0, %v450
        %v452 = vrot.slane %v447, %v451
        %v453 = vlaneseq
        %v454 = vshrl.u32 %v453, 7
        %v455 = vsub.s32 1, %v454
        %v456 = vrot.slane %v447, %v455
        %v457 = vlaneseq
        %v458 = vshrl.u32 %v457, 7
        %v459 = vsub.s32 2, %v458
        %v460 = vrot.slane %v447, %v459
        %v496 = vunpack.c.l.b16 %v415
        %v497 = vunpack.c.h.b16 %v415
        %v498 = vunpack.c.l.b16 %v416
        %v499 = vunpack.c.l.b16 %v417
        %v500 = vunpack.c.h.b16 %v417
        %v501 = vunpack.c.l.b16 %v418
        %v502 = vunpack.c.l.b16 %v419
        %v503 = vunpack.c.h.b16 %v419
        %v504 = vunpack.c.l.b16 %v420
        %v505 = vunpack.c.l.b16 %v421
        %v506 = vunpack.c.h.b16 %v421
        %v507 = vunpack.c.l.b16 %v422
        %v508 = vunpack.c.l.b16 %v423
        %v509 = vunpack.c.h.b16 %v423
        %v510 = vunpack.c.l.b16 %v424
        %v511 = vunpack.c.l.b16 %v425
        %v512 = vunpack.c.h.b16 %v425
        %v513 = vunpack.c.l.b16 %v426
        %v514 = vunpack.c.l.b16 %v427
        %v515 = vunpack.c.h.b16 %v427
        %v516 = vunpack.c.l.b16 %v428
        %v517 = vunpack.c.l.b16 %v429
        %v518 = vunpack.c.h.b16 %v429
        %v519 = vunpack.c.l.b16 %v430
        %v520 = vunpack.c.l.b16 %v431
        %v521 = vunpack.c.h.b16 %v431
        %v522 = vunpack.c.l.b16 %v432
        %v523 = vunpack.c.l.b16 %v433
        %v524 = vunpack.c.h.b16 %v433
        %v525 = vunpack.c.l.b16 %v434
        %v526 = vunpack.c.l.b16 %v435
        %v527 = vunpack.c.h.b16 %v435
        %v528 = vunpack.c.l.b16 %v436
        %v529 = vunpack.c.l.b16 %v437
        %v530 = vunpack.c.h.b16 %v437
        %v531 = vunpack.c.l.b16 %v438
        %v532 = vunpack.c.l.b16 %v439
        %v533 = vunpack.c.h.b16 %v439
        %v534 = vunpack.c.l.b16 %v440
        %v535 = vunpack.c.l.b16 %v441
        %v536 = vunpack.c.h.b16 %v441
        %v537 = vunpack.c.l.b16 %v442
        %v538 = vunpack.c.l.b16 %v443
        %v539 = vunpack.c.h.b16 %v443
        %v540 = vunpack.c.l.b16 %v444
        %v541 = vunpack.c.l.b16 %v445
        %v542 = vunpack.c.h.b16 %v445
        %v543 = vunpack.c.l.b16 %v446
        %v544 = vpack.c.b16 %v499, %v496
        %v545 = vpack.c.b16 %v500, %v497
        %v546 = vpack.c.b16 %v501, %v498
        %v547 = vpack.c.b16 %v505, %v502
        %v548 = vpack.c.b16 %v506, %v503
        %v549 = vpack.c.b16 %v507, %v504
        %v550 = vpack.c.b16 %v511, %v508
        %v551 = vpack.c.b16 %v512, %v509
        %v552 = vpack.c.b16 %v513, %v510
        %v553 = vpack.c.b16 %v517, %v514
        %v554 = vpack.c.b16 %v518, %v515
        %v555 = vpack.c.b16 %v519, %v516
        %v556 = vpack.c.b16 %v523, %v520
        %v557 = vpack.c.b16 %v524, %v521
        %v558 = vpack.c.b16 %v525, %v522
        %v559 = vpack.c.b16 %v529, %v526
        %v560 = vpack.c.b16 %v530, %v527
        %v561 = vpack.c.b16 %v531, %v528
        %v562 = vpack.c.b16 %v535, %v532
        %v563 = vpack.c.b16 %v536, %v533
        %v564 = vpack.c.b16 %v537, %v534
        %v565 = vpack.c.b16 %v541, %v538
        %v566 = vpack.c.b16 %v542, %v539
        %v567 = vpack.c.b16 %v543, %v540
        %592 = vmatprep.subr.bf16.mxu0 %v545
        %593 = vmatpush1.bf16.msra.mxu0 %v544
        %594 = vmatprep.subr.bf16.mxu0 %v548
        %595 = vmatpush1.bf16.msra.mxu0 %v547
        %596 = vmatprep.subr.bf16.mxu0 %v551
        %597 = vmatpush1.bf16.msra.mxu0 %v550
        %598 = vmatprep.subr.bf16.mxu0 %v554
        %599 = vmatpush1.bf16.msra.mxu0 %v553
        %600 = vmatprep.subr.bf16.mxu0 %v557
        %601 = vmatpush1.bf16.msra.mxu0 %v556
        %602 = vmatprep.subr.bf16.mxu0 %v560
        %603 = vmatpush1.bf16.msra.mxu0 %v559
        %604 = vmatprep.subr.bf16.mxu0 %v563
        %605 = vmatpush1.bf16.msra.mxu0 %v562
        %606 = vmatprep.subr.bf16.mxu0 %v566
        %607 = vmatpush1.bf16.msra.mxu0 %v565
        %608 = vmatprep.subr.bf16.mxu0 0
        %609 = vmatpush1.bf16.msra.mxu0 0
        %610 = vmatprep.subr.bf16.mxu0 0
        %611 = vmatpush1.bf16.msra.mxu0 0
        %612 = vmatprep.subr.bf16.mxu0 0
        %613 = vmatpush1.bf16.msra.mxu0 0
        %614 = vmatprep.subr.bf16.mxu0 0
        %615 = vmatpush1.bf16.msra.mxu0 0
        %616 = vmatprep.subr.bf16.mxu0 0
        %617 = vmatpush1.bf16.msra.mxu0 0
        %618 = vmatprep.subr.bf16.mxu0 0
        %619 = vmatpush1.bf16.msra.mxu0 0
        %620 = vmatprep.subr.bf16.mxu0 0
        %621 = vmatpush1.bf16.msra.mxu0 0
        %622 = vmatprep.subr.bf16.mxu0 0
        %623 = vmatpush1.bf16.msra.mxu0 0
        %624 = vmatprep.mubr.bf16.mxu0 0
        %625 = vmatmul.mubr.bf16.gmra.mrb[0].mxu0 %v414
        %v626 = vpop.f32.mrb[0].mxu0
        %v627 = vadd.f32 %v452, %v626
        %v628 = vpop.f32.mrb[0].mxu0
        %v629 = vadd.f32 %v456, %v628
        %v630 = vpop.f32.mrb[0].mxu0
        %v631 = vpop.f32.mrb[0].mxu0
        %632 = vdwg.mxu0
        %633 = vmatprep.subr.bf16.mxu0 0
        %634 = vmatpush1.bf16.msra.mxu0 %v546
        %635 = vmatprep.subr.bf16.mxu0 0
        %636 = vmatpush1.bf16.msra.mxu0 %v549
        %637 = vmatprep.subr.bf16.mxu0 0
        %638 = vmatpush1.bf16.msra.mxu0 %v552
        %639 = vmatprep.subr.bf16.mxu0 0
        %640 = vmatpush1.bf16.msra.mxu0 %v555
        %641 = vmatprep.subr.bf16.mxu0 0
        %642 = vmatpush1.bf16.msra.mxu0 %v558
        %643 = vmatprep.subr.bf16.mxu0 0
        %644 = vmatpush1.bf16.msra.mxu0 %v561
        %645 = vmatprep.subr.bf16.mxu0 0
        %646 = vmatpush1.bf16.msra.mxu0 %v564
        %647 = vmatprep.subr.bf16.mxu0 0
        %648 = vmatpush1.bf16.msra.mxu0 %v567
        %649 = vmatprep.subr.bf16.mxu0 0
        %650 = vmatpush1.bf16.msra.mxu0 0
        %651 = vmatprep.subr.bf16.mxu0 0
        %652 = vmatpush1.bf16.msra.mxu0 0
        %653 = vmatprep.subr.bf16.mxu0 0
        %654 = vmatpush1.bf16.msra.mxu0 0
        %655 = vmatprep.subr.bf16.mxu0 0
        %656 = vmatpush1.bf16.msra.mxu0 0
        %657 = vmatprep.subr.bf16.mxu0 0
        %658 = vmatpush1.bf16.msra.mxu0 0
        %659 = vmatprep.subr.bf16.mxu0 0
        %660 = vmatpush1.bf16.msra.mxu0 0
        %661 = vmatprep.subr.bf16.mxu0 0
        %662 = vmatpush1.bf16.msra.mxu0 0
        %663 = vmatprep.subr.bf16.mxu0 0
        %664 = vmatpush1.bf16.msra.mxu0 0
        %665 = vmatprep.mubr.bf16.mxu0 0
        %666 = vmatmul.mubr.bf16.gmra.mrb[0].mxu0 %v414
        %v667 = vpop.f32.mrb[0].mxu0
        %v668 = vadd.f32 %v460, %v667
        %v669 = vpop.f32.mrb[0].mxu0
        %v670 = vpop.f32.mrb[0].mxu0
        %v671 = vpop.f32.mrb[0].mxu0
        %672 = vdwg.mxu0
        %v673 = vld [vmem:[#allocation12] sm:$0xff]
        %v674 = vld [vmem:[#allocation14] sm:$0xff]
        %v675 = vld [vmem:[#allocation15] sm:$0xff]
        %676 = vrot.lane.b32.xlu0 %v627, 120
        %v677 = vpop.permute.xlu0 %676
        %678 = vrot.lane.b32.xlu0 %v627, 8
        %v679 = vpop.permute.xlu0 %678
        %v680 = vmul.f32 %v627, %v673
        %v681 = vmul.f32 %v677, %v674
        %v682 = vadd.f32 %v680, %v681
        %v683 = vmul.f32 %v679, %v675
        %v684 = vadd.f32 %v682, %v683
        %v685 = vpack.c.bf16 %v684, %v684
        %686 = vrot.lane.b32.xlu0 %v629, 120
        %v687 = vpop.permute.xlu0 %686
        %688 = vrot.lane.b32.xlu0 %v629, 8
        %v689 = vpop.permute.xlu0 %688
        %v690 = vmul.f32 %v629, %v673
        %v691 = vmul.f32 %v687, %v674
        %v692 = vadd.f32 %v690, %v691
        %v693 = vmul.f32 %v689, %v675
        %v694 = vadd.f32 %v692, %v693
        %v695 = vpack.c.bf16 %v694, %v694
        %v696 = vpack.c.bf16 %v668, %v668
        %vm697 = vcmask 261120
        %v699 = vsel %vm697, %v685, 0
        %v702 = vsel %vm697, %v695, 0
        %704 = vmatprep.subr.bf16.mxu0 0
        %705 = vmatpush1.bf16.xpose.msra.mxu0 %v702
        %706 = vmatprep.subr.bf16.mxu0 0
        %707 = vmatpush1.bf16.xpose.msra.mxu0 0
        %708 = vmatprep.subr.bf16.mxu0 0
        %709 = vmatpush1.bf16.xpose.msra.mxu0 0
        %710 = vmatprep.subr.bf16.mxu0 0
        %711 = vmatpush1.bf16.xpose.msra.mxu0 0
        %712 = vmatprep.subr.bf16.mxu0 0
        %713 = vmatpush1.bf16.xpose.msra.mxu0 0
        %714 = vmatprep.subr.bf16.mxu0 0
        %715 = vmatpush1.bf16.xpose.msra.mxu0 0
        %716 = vmatprep.subr.bf16.mxu0 0
        %717 = vmatpush1.bf16.xpose.msra.mxu0 0
        %718 = vmatprep.subr.bf16.mxu0 0
        %719 = vmatpush1.bf16.xpose.msra.mxu0 0
        %720 = vmatprep.subr.bf16.mxu0 0
        %721 = vmatpush1.bf16.xpose.msra.mxu0 0
        %722 = vmatprep.subr.bf16.mxu0 0
        %723 = vmatpush1.bf16.xpose.msra.mxu0 0
        %724 = vmatprep.subr.bf16.mxu0 0
        %725 = vmatpush1.bf16.xpose.msra.mxu0 0
        %726 = vmatprep.subr.bf16.mxu0 0
        %727 = vmatpush1.bf16.xpose.msra.mxu0 0
        %728 = vmatprep.subr.bf16.mxu0 0
        %729 = vmatpush1.bf16.xpose.msra.mxu0 0
        %730 = vmatprep.subr.bf16.mxu0 0
        %731 = vmatpush1.bf16.xpose.msra.mxu0 0
        %732 = vmatprep.subr.bf16.mxu0 0
        %733 = vmatpush1.bf16.xpose.msra.mxu0 0
        %734 = vmatprep.subr.bf16.mxu0 0
        %735 = vmatpush1.bf16.xpose.msra.mxu0 0
        %736 = vmatprep.mubr.bf16.mxu0 0
        %737 = vmatmul.mubr.bf16.gmra.mrb[0].mxu0 %v699
        %v738 = vpop.f32.mrb[0].mxu0
        %v739 = vadd.f32 0.0, %v738
        %v740 = vpop.f32.mrb[0].mxu0
        %v741 = vpop.f32.mrb[0].mxu0
        %v742 = vpop.f32.mrb[0].mxu0
        %743 = vdwg.mxu0
        %vm744 = vcmask 64512
        %v745 = vsel %vm744, %v739, -inf
        %746 = vmax.xlane.f32.xlu0 %v745
        %v747 = vpop.xlane.xlu0 %746
        %v748 = vsub.f32 %v739, %v747
        %v749 = vmul.f32 %v748, 1.442695
        %v750 = vpow.pop %v749
        %v751 = vsel %vm744, %v750, 0.0
        %752 = vadd.xlane.f32.xlu0 %v751
        %v753 = vpop.xlane.xlu0 %752
        %v754 = vpack.c.bf16 %v750, %v750
        %v756 = vsel %vm744, %v754, 0
        %vm758 = vcmask 1043456
        %v760 = vsel %vm758, %v696, 0
        %762 = vmatprep.subr.bf16.mxu0 0
        %763 = vmatpush1.bf16.msra.mxu0 %v760
        %764 = vmatprep.subr.bf16.mxu0 0
        %765 = vmatpush1.bf16.msra.mxu0 0
        %766 = vmatprep.subr.bf16.mxu0 0
        %767 = vmatpush1.bf16.msra.mxu0 0
        %768 = vmatprep.subr.bf16.mxu0 0
        %769 = vmatpush1.bf16.msra.mxu0 0
        %770 = vmatprep.subr.bf16.mxu0 0
        %771 = vmatpush1.bf16.msra.mxu0 0
        %772 = vmatprep.subr.bf16.mxu0 0
        %773 = vmatpush1.bf16.msra.mxu0 0
        %774 = vmatprep.subr.bf16.mxu0 0
        %775 = vmatpush1.bf16.msra.mxu0 0
        %776 = vmatprep.subr.bf16.mxu0 0
        %777 = vmatpush1.bf16.msra.mxu0 0
        %778 = vmatprep.subr.bf16.mxu0 0
        %779 = vmatpush1.bf16.msra.mxu0 0
        %780 = vmatprep.subr.bf16.mxu0 0
        %781 = vmatpush1.bf16.msra.mxu0 0
        %782 = vmatprep.subr.bf16.mxu0 0
        %783 = vmatpush1.bf16.msra.mxu0 0
        %784 = vmatprep.subr.bf16.mxu0 0
        %785 = vmatpush1.bf16.msra.mxu0 0
        %786 = vmatprep.subr.bf16.mxu0 0
        %787 = vmatpush1.bf16.msra.mxu0 0
        %788 = vmatprep.subr.bf16.mxu0 0
        %789 = vmatpush1.bf16.msra.mxu0 0
        %790 = vmatprep.subr.bf16.mxu0 0
        %791 = vmatpush1.bf16.msra.mxu0 0
        %792 = vmatprep.subr.bf16.mxu0 0
        %793 = vmatpush1.bf16.msra.mxu0 0
        %794 = vmatprep.mubr.bf16.mxu0 0
        %795 = vmatmul.mubr.bf16.gmra.mrb[0].mxu0 %v756
        %v796 = vpop.f32.mrb[0].mxu0
        %v797 = vadd.f32 0.0, %v796
        %v798 = vpop.f32.mrb[0].mxu0
        %v799 = vpop.f32.mrb[0].mxu0
        %v800 = vpop.f32.mrb[0].mxu0
        %801 = vdwg.mxu0
        %v802 = vrcp.pop %v753
        %v803 = vmul.f32 %v797, %v802
        %804 = vst.msk [vmem:[#allocation2] sm:$0xff] %vm697, %v803
        %806 = vrot.lane.b32.xlu0 %v685, 96
        %v807 = vpop.permute.xlu0 %806
        %809 = vrot.lane.b32.xlu0 %v695, 96
        %v810 = vpop.permute.xlu0 %809
        %v812 = vsel %vm697, %v807, 0
        %v815 = vsel %vm697, %v810, 0
        %817 = vmatprep.subr.bf16.mxu0 0
        %818 = vmatpush1.bf16.xpose.msra.mxu0 %v815
        %819 = vmatprep.subr.bf16.mxu0 0
        %820 = vmatpush1.bf16.xpose.msra.mxu0 0
        %821 = vmatprep.subr.bf16.mxu0 0
        %822 = vmatpush1.bf16.xpose.msra.mxu0 0
        %823 = vmatprep.subr.bf16.mxu0 0
        %824 = vmatpush1.bf16.xpose.msra.mxu0 0
        %825 = vmatprep.subr.bf16.mxu0 0
        %826 = vmatpush1.bf16.xpose.msra.mxu0 0
        %827 = vmatprep.subr.bf16.mxu0 0
        %828 = vmatpush1.bf16.xpose.msra.mxu0 0
        %829 = vmatprep.subr.bf16.mxu0 0
        %830 = vmatpush1.bf16.xpose.msra.mxu0 0
        %831 = vmatprep.subr.bf16.mxu0 0
        %832 = vmatpush1.bf16.xpose.msra.mxu0 0
        %833 = vmatprep.subr.bf16.mxu0 0
        %834 = vmatpush1.bf16.xpose.msra.mxu0 0
        %835 = vmatprep.subr.bf16.mxu0 0
        %836 = vmatpush1.bf16.xpose.msra.mxu0 0
        %837 = vmatprep.subr.bf16.mxu0 0
        %838 = vmatpush1.bf16.xpose.msra.mxu0 0
        %839 = vmatprep.subr.bf16.mxu0 0
        %840 = vmatpush1.bf16.xpose.msra.mxu0 0
        %841 = vmatprep.subr.bf16.mxu0 0
        %842 = vmatpush1.bf16.xpose.msra.mxu0 0
        %843 = vmatprep.subr.bf16.mxu0 0
        %844 = vmatpush1.bf16.xpose.msra.mxu0 0
        %845 = vmatprep.subr.bf16.mxu0 0
        %846 = vmatpush1.bf16.xpose.msra.mxu0 0
        %847 = vmatprep.subr.bf16.mxu0 0
        %848 = vmatpush1.bf16.xpose.msra.mxu0 0
        %849 = vmatprep.mubr.bf16.mxu0 0
        %850 = vmatmul.mubr.bf16.gmra.mrb[0].mxu0 %v812
        %v851 = vpop.f32.mrb[0].mxu0
        %v852 = vadd.f32 0.0, %v851
        %v853 = vpop.f32.mrb[0].mxu0
        %v854 = vpop.f32.mrb[0].mxu0
        %v855 = vpop.f32.mrb[0].mxu0
        %856 = vdwg.mxu0
        %v857 = vsel %vm744, %v852, -inf
        %858 = vmax.xlane.f32.xlu0 %v857
        %v859 = vpop.xlane.xlu0 %858
        %v860 = vsub.f32 %v852, %v859
        %v861 = vmul.f32 %v860, 1.442695
        %v862 = vpow.pop %v861
        %v863 = vsel %vm744, %v862, 0.0
        %864 = vadd.xlane.f32.xlu0 %v863
        %v865 = vpop.xlane.xlu0 %864
        %v866 = vpack.c.bf16 %v862, %v862
        %868 = vrot.lane.b32.xlu0 %v696, 96
        %v869 = vpop.permute.xlu0 %868
        %v871 = vsel %vm744, %v866, 0
        %v874 = vsel %vm758, %v869, 0
        %876 = vmatprep.subr.bf16.mxu0 0
        %877 = vmatpush1.bf16.msra.mxu0 %v874
        %878 = vmatprep.subr.bf16.mxu0 0
        %879 = vmatpush1.bf16.msra.mxu0 0
        %880 = vmatprep.subr.bf16.mxu0 0
        %881 = vmatpush1.bf16.msra.mxu0 0
        %882 = vmatprep.subr.bf16.mxu0 0
        %883 = vmatpush1.bf16.msra.mxu0 0
        %884 = vmatprep.subr.bf16.mxu0 0
        %885 = vmatpush1.bf16.msra.mxu0 0
        %886 = vmatprep.subr.bf16.mxu0 0
        %887 = vmatpush1.bf16.msra.mxu0 0
        %888 = vmatprep.subr.bf16.mxu0 0
        %889 = vmatpush1.bf16.msra.mxu0 0
        %890 = vmatprep.subr.bf16.mxu0 0
        %891 = vmatpush1.bf16.msra.mxu0 0
        %892 = vmatprep.subr.bf16.mxu0 0
        %893 = vmatpush1.bf16.msra.mxu0 0
        %894 = vmatprep.subr.bf16.mxu0 0
        %895 = vmatpush1.bf16.msra.mxu0 0
        %896 = vmatprep.subr.bf16.mxu0 0
        %897 = vmatpush1.bf16.msra.mxu0 0
        %898 = vmatprep.subr.bf16.mxu0 0
        %899 = vmatpush1.bf16.msra.mxu0 0
        %900 = vmatprep.subr.bf16.mxu0 0
        %901 = vmatpush1.bf16.msra.mxu0 0
        %902 = vmatprep.subr.bf16.mxu0 0
        %903 = vmatpush1.bf16.msra.mxu0 0
        %904 = vmatprep.subr.bf16.mxu0 0
        %905 = vmatpush1.bf16.msra.mxu0 0
        %906 = vmatprep.subr.bf16.mxu0 0
        %907 = vmatpush1.bf16.msra.mxu0 0
        %908 = vmatprep.mubr.bf16.mxu0 0
        %909 = vmatmul.mubr.bf16.gmra.mrb[0].mxu0 %v871
        %v910 = vpop.f32.mrb[0].mxu0
        %v911 = vadd.f32 0.0, %v910
        %v912 = vpop.f32.mrb[0].mxu0
        %v913 = vpop.f32.mrb[0].mxu0
        %v914 = vpop.f32.mrb[0].mxu0
        %915 = vdwg.mxu0
        %v916 = vrcp.pop %v865
        %v917 = vmul.f32 %v911, %v916
        %919 = vrot.lane.b32.xlu0 %v917, 32
        %v920 = vpop.permute.xlu0 %919
        %vm922 = vcmask 523520
        %923 = vst.msk [vmem:[#allocation2] sm:$0xff] %vm922, %v920
        %924 = vrot.lane.b32.xlu0 %v685, 64
        %v925 = vpop.permute.xlu0 %924
        %926 = vrot.lane.b32.xlu0 %v695, 64
        %v927 = vpop.permute.xlu0 %926
        %v929 = vsel %vm697, %v925, 0
        %v932 = vsel %vm697, %v927, 0
        %934 = vmatprep.subr.bf16.mxu0 0
        %935 = vmatpush1.bf16.xpose.msra.mxu0 %v932
        %936 = vmatprep.subr.bf16.mxu0 0
        %937 = vmatpush1.bf16.xpose.msra.mxu0 0
        %938 = vmatprep.subr.bf16.mxu0 0
        %939 = vmatpush1.bf16.xpose.msra.mxu0 0
        %940 = vmatprep.subr.bf16.mxu0 0
        %941 = vmatpush1.bf16.xpose.msra.mxu0 0
        %942 = vmatprep.subr.bf16.mxu0 0
        %943 = vmatpush1.bf16.xpose.msra.mxu0 0
        %944 = vmatprep.subr.bf16.mxu0 0
        %945 = vmatpush1.bf16.xpose.msra.mxu0 0
        %946 = vmatprep.subr.bf16.mxu0 0
        %947 = vmatpush1.bf16.xpose.msra.mxu0 0
        %948 = vmatprep.subr.bf16.mxu0 0
        %949 = vmatpush1.bf16.xpose.msra.mxu0 0
        %950 = vmatprep.subr.bf16.mxu0 0
        %951 = vmatpush1.bf16.xpose.msra.mxu0 0
        %952 = vmatprep.subr.bf16.mxu0 0
        %953 = vmatpush1.bf16.xpose.msra.mxu0 0
        %954 = vmatprep.subr.bf16.mxu0 0
        %955 = vmatpush1.bf16.xpose.msra.mxu0 0
        %956 = vmatprep.subr.bf16.mxu0 0
        %957 = vmatpush1.bf16.xpose.msra.mxu0 0
        %958 = vmatprep.subr.bf16.mxu0 0
        %959 = vmatpush1.bf16.xpose.msra.mxu0 0
        %960 = vmatprep.subr.bf16.mxu0 0
        %961 = vmatpush1.bf16.xpose.msra.mxu0 0
        %962 = vmatprep.subr.bf16.mxu0 0
        %963 = vmatpush1.bf16.xpose.msra.mxu0 0
        %964 = vmatprep.subr.bf16.mxu0 0
        %965 = vmatpush1.bf16.xpose.msra.mxu0 0
        %966 = vmatprep.mubr.bf16.mxu0 0
        %967 = vmatmul.mubr.bf16.gmra.mrb[0].mxu0 %v929
        %v968 = vpop.f32.mrb[0].mxu0
        %v969 = vadd.f32 0.0, %v968
        %v970 = vpop.f32.mrb[0].mxu0
        %v971 = vpop.f32.mrb[0].mxu0
        %v972 = vpop.f32.mrb[0].mxu0
        %973 = vdwg.mxu0
        %v974 = vsel %vm744, %v969, -inf
        %975 = vmax.xlane.f32.xlu0 %v974
        %v976 = vpop.xlane.xlu0 %975
        %v977 = vsub.f32 %v969, %v976
        %v978 = vmul.f32 %v977, 1.442695
        %v979 = vpow.pop %v978
        %v980 = vsel %vm744, %v979, 0.0
        %981 = vadd.xlane.f32.xlu0 %v980
        %v982 = vpop.xlane.xlu0 %981
        %v983 = vpack.c.bf16 %v979, %v979
        %984 = vrot.lane.b32.xlu0 %v696, 64
        %v985 = vpop.permute.xlu0 %984
        %v987 = vsel %vm744, %v983, 0
        %v990 = vsel %vm758, %v985, 0
        %992 = vmatprep.subr.bf16.mxu0 0
        %993 = vmatpush1.bf16.msra.mxu0 %v990
        %994 = vmatprep.subr.bf16.mxu0 0
        %995 = vmatpush1.bf16.msra.mxu0 0
        %996 = vmatprep.subr.bf16.mxu0 0
        %997 = vmatpush1.bf16.msra.mxu0 0
        %998 = vmatprep.subr.bf16.mxu0 0
        %999 = vmatpush1.bf16.msra.mxu0 0
        %1000 = vmatprep.subr.bf16.mxu0 0
        %1001 = vmatpush1.bf16.msra.mxu0 0
        %1002 = vmatprep.subr.bf16.mxu0 0
        %1003 = vmatpush1.bf16.msra.mxu0 0
        %1004 = vmatprep.subr.bf16.mxu0 0
        %1005 = vmatpush1.bf16.msra.mxu0 0
        %1006 = vmatprep.subr.bf16.mxu0 0
        %1007 = vmatpush1.bf16.msra.mxu0 0
        %1008 = vmatprep.subr.bf16.mxu0 0
        %1009 = vmatpush1.bf16.msra.mxu0 0
        %1010 = vmatprep.subr.bf16.mxu0 0
        %1011 = vmatpush1.bf16.msra.mxu0 0
        %1012 = vmatprep.subr.bf16.mxu0 0
        %1013 = vmatpush1.bf16.msra.mxu0 0
        %1014 = vmatprep.subr.bf16.mxu0 0
        %1015 = vmatpush1.bf16.msra.mxu0 0
        %1016 = vmatprep.subr.bf16.mxu0 0
        %1017 = vmatpush1.bf16.msra.mxu0 0
        %1018 = vmatprep.subr.bf16.mxu0 0
        %1019 = vmatpush1.bf16.msra.mxu0 0
        %1020 = vmatprep.subr.bf16.mxu0 0
        %1021 = vmatpush1.bf16.msra.mxu0 0
        %1022 = vmatprep.subr.bf16.mxu0 0
        %1023 = vmatpush1.bf16.msra.mxu0 0
        %1024 = vmatprep.mubr.bf16.mxu0 0
        %1025 = vmatmul.mubr.bf16.gmra.mrb[0].mxu0 %v987
        %v1026 = vpop.f32.mrb[0].mxu0
        %v1027 = vadd.f32 0.0, %v1026
        %v1028 = vpop.f32.mrb[0].mxu0
        %v1029 = vpop.f32.mrb[0].mxu0
        %v1030 = vpop.f32.mrb[0].mxu0
        %1031 = vdwg.mxu0
        %v1032 = vrcp.pop %v982
        %v1033 = vmul.f32 %v1027, %v1032
        %1035 = vrot.lane.b32.xlu0 %v1033, 64
        %v1036 = vpop.permute.xlu0 %1035
        %vm1038 = vcmask 785920
        %1039 = vst.msk [vmem:[#allocation2] sm:$0xff] %vm1038, %v1036
        %1040 = vrot.lane.b32.xlu0 %v685, 32
        %v1041 = vpop.permute.xlu0 %1040
        %1042 = vrot.lane.b32.xlu0 %v695, 32
        %v1043 = vpop.permute.xlu0 %1042
        %v1045 = vsel %vm697, %v1041, 0
        %v1048 = vsel %vm697, %v1043, 0
        %1050 = vmatprep.subr.bf16.mxu0 0
        %1051 = vmatpush1.bf16.xpose.msra.mxu0 %v1048
        %1052 = vmatprep.subr.bf16.mxu0 0
        %1053 = vmatpush1.bf16.xpose.msra.mxu0 0
        %1054 = vmatprep.subr.bf16.mxu0 0
        %1055 = vmatpush1.bf16.xpose.msra.mxu0 0
        %1056 = vmatprep.subr.bf16.mxu0 0
        %1057 = vmatpush1.bf16.xpose.msra.mxu0 0
        %1058 = vmatprep.subr.bf16.mxu0 0
        %1059 = vmatpush1.bf16.xpose.msra.mxu0 0
        %1060 = vmatprep.subr.bf16.mxu0 0
        %1061 = vmatpush1.bf16.xpose.msra.mxu0 0
        %1062 = vmatprep.subr.bf16.mxu0 0
        %1063 = vmatpush1.bf16.xpose.msra.mxu0 0
        %1064 = vmatprep.subr.bf16.mxu0 0
        %1065 = vmatpush1.bf16.xpose.msra.mxu0 0
        %1066 = vmatprep.subr.bf16.mxu0 0
        %1067 = vmatpush1.bf16.xpose.msra.mxu0 0
        %1068 = vmatprep.subr.bf16.mxu0 0
        %1069 = vmatpush1.bf16.xpose.msra.mxu0 0
        %1070 = vmatprep.subr.bf16.mxu0 0
        %1071 = vmatpush1.bf16.xpose.msra.mxu0 0
        %1072 = vmatprep.subr.bf16.mxu0 0
        %1073 = vmatpush1.bf16.xpose.msra.mxu0 0
        %1074 = vmatprep.subr.bf16.mxu0 0
        %1075 = vmatpush1.bf16.xpose.msra.mxu0 0
        %1076 = vmatprep.subr.bf16.mxu0 0
        %1077 = vmatpush1.bf16.xpose.msra.mxu0 0
        %1078 = vmatprep.subr.bf16.mxu0 0
        %1079 = vmatpush1.bf16.xpose.msra.mxu0 0
        %1080 = vmatprep.subr.bf16.mxu0 0
        %1081 = vmatpush1.bf16.xpose.msra.mxu0 0
        %1082 = vmatprep.mubr.bf16.mxu0 0
        %1083 = vmatmul.mubr.bf16.gmra.mrb[0].mxu0 %v1045
        %v1084 = vpop.f32.mrb[0].mxu0
        %v1085 = vadd.f32 0.0, %v1084
        %v1086 = vpop.f32.mrb[0].mxu0
        %v1087 = vpop.f32.mrb[0].mxu0
        %v1088 = vpop.f32.mrb[0].mxu0
        %1089 = vdwg.mxu0
        %v1090 = vsel %vm744, %v1085, -inf
        %1091 = vmax.xlane.f32.xlu0 %v1090
        %v1092 = vpop.xlane.xlu0 %1091
        %v1093 = vsub.f32 %v1085, %v1092
        %v1094 = vmul.f32 %v1093, 1.442695
        %v1095 = vpow.pop %v1094
        %v1096 = vsel %vm744, %v1095, 0.0
        %1097 = vadd.xlane.f32.xlu0 %v1096
        %v1098 = vpop.xlane.xlu0 %1097
        %v1099 = vpack.c.bf16 %v1095, %v1095
        %1100 = vrot.lane.b32.xlu0 %v696, 32
        %v1101 = vpop.permute.xlu0 %1100
        %v1103 = vsel %vm744, %v1099, 0
        %v1106 = vsel %vm758, %v1101, 0
        %1108 = vmatprep.subr.bf16.mxu0 0
        %1109 = vmatpush1.bf16.msra.mxu0 %v1106
        %1110 = vmatprep.subr.bf16.mxu0 0
        %1111 = vmatpush1.bf16.msra.mxu0 0
        %1112 = vmatprep.subr.bf16.mxu0 0
        %1113 = vmatpush1.bf16.msra.mxu0 0
        %1114 = vmatprep.subr.bf16.mxu0 0
        %1115 = vmatpush1.bf16.msra.mxu0 0
        %1116 = vmatprep.subr.bf16.mxu0 0
        %1117 = vmatpush1.bf16.msra.mxu0 0
        %1118 = vmatprep.subr.bf16.mxu0 0
        %1119 = vmatpush1.bf16.msra.mxu0 0
        %1120 = vmatprep.subr.bf16.mxu0 0
        %1121 = vmatpush1.bf16.msra.mxu0 0
        %1122 = vmatprep.subr.bf16.mxu0 0
        %1123 = vmatpush1.bf16.msra.mxu0 0
        %1124 = vmatprep.subr.bf16.mxu0 0
        %1125 = vmatpush1.bf16.msra.mxu0 0
        %1126 = vmatprep.subr.bf16.mxu0 0
        %1127 = vmatpush1.bf16.msra.mxu0 0
        %1128 = vmatprep.subr.bf16.mxu0 0
        %1129 = vmatpush1.bf16.msra.mxu0 0
        %1130 = vmatprep.subr.bf16.mxu0 0
        %1131 = vmatpush1.bf16.msra.mxu0 0
        %1132 = vmatprep.subr.bf16.mxu0 0
        %1133 = vmatpush1.bf16.msra.mxu0 0
        %1134 = vmatprep.subr.bf16.mxu0 0
        %1135 = vmatpush1.bf16.msra.mxu0 0
        %1136 = vmatprep.subr.bf16.mxu0 0
        %1137 = vmatpush1.bf16.msra.mxu0 0
        %1138 = vmatprep.subr.bf16.mxu0 0
        %1139 = vmatpush1.bf16.msra.mxu0 0
        %1140 = vmatprep.mubr.bf16.mxu0 0
        %1141 = vmatmul.mubr.bf16.gmra.mrb[0].mxu0 %v1103
        %v1142 = vpop.f32.mrb[0].mxu0
        %v1143 = vadd.f32 0.0, %v1142
        %v1144 = vpop.f32.mrb[0].mxu0
        %v1145 = vpop.f32.mrb[0].mxu0
        %v1146 = vpop.f32.mrb[0].mxu0
        %1147 = vdwg.mxu0
        %v1148 = vrcp.pop %v1098
        %v1149 = vmul.f32 %v1143, %v1148
        %1151 = vrot.lane.b32.xlu0 %v1149, 96
        %v1152 = vpop.permute.xlu0 %1151
        %vm1154 = vcmask 1048320
        %1155 = vst.msk [vmem:[#allocation2] sm:$0xff] %vm1154, %v1152
        %v1156 = vld [vmem:[#allocation2] sm:$0xff]
        %v1157 = vpack.c.bf16 %v1156, %v1156
        %v1158 = vld [vmem:[#allocation8] sm:$0xf]
        %v1159 = vld [vmem:[#allocation8 + $0x4] sm:$0xf]
        %v1160 = vld [vmem:[#allocation8 + $0x8] sm:$0xf]
        %v1161 = vld [vmem:[#allocation8 + $0xc] sm:$0xf]
        %v1162 = vld [vmem:[#allocation8 + $0x10] sm:$0xf]
        %v1163 = vld [vmem:[#allocation8 + $0x14] sm:$0xf]
        %v1164 = vld [vmem:[#allocation8 + $0x18] sm:$0xf]
        %v1165 = vld [vmem:[#allocation8 + $0x1c] sm:$0xf]
        %v1166 = vld [vmem:[#allocation8 + $0x20] sm:$0xf]
        %v1167 = vld [vmem:[#allocation8 + $0x24] sm:$0xf]
        %v1168 = vld [vmem:[#allocation8 + $0x28] sm:$0xf]
        %v1169 = vld [vmem:[#allocation8 + $0x2c] sm:$0xf]
        %v1170 = vld [vmem:[#allocation8 + $0x30] sm:$0xf]
        %v1171 = vld [vmem:[#allocation8 + $0x34] sm:$0xf]
        %v1172 = vld [vmem:[#allocation8 + $0x38] sm:$0xf]
        %v1173 = vld [vmem:[#allocation8 + $0x3c] sm:$0xf]
        %v1174 = vld [vmem:[#allocation11] sm:$0x1]
        %v1176 = vlaneseq
        %v1177 = vshrl.u32 %v1176, 7
        %v1178 = vsub.s32 0, %v1177
        %v1179 = vrot.slane %v1174, %v1178
        %v1197 = vunpack.c.l.b16 %v1158
        %v1198 = vunpack.c.l.b16 %v1159
        %v1199 = vunpack.c.l.b16 %v1160
        %v1200 = vunpack.c.l.b16 %v1161
        %v1201 = vunpack.c.l.b16 %v1162
        %v1202 = vunpack.c.l.b16 %v1163
        %v1203 = vunpack.c.l.b16 %v1164
        %v1204 = vunpack.c.l.b16 %v1165
        %v1205 = vunpack.c.l.b16 %v1166
        %v1206 = vunpack.c.l.b16 %v1167
        %v1207 = vunpack.c.l.b16 %v1168
        %v1208 = vunpack.c.l.b16 %v1169
        %v1209 = vunpack.c.l.b16 %v1170
        %v1210 = vunpack.c.l.b16 %v1171
        %v1211 = vunpack.c.l.b16 %v1172
        %v1212 = vunpack.c.l.b16 %v1173
        %v1213 = vpack.c.b16 %v1198, %v1197
        %v1214 = vpack.c.b16 %v1200, %v1199
        %v1215 = vpack.c.b16 %v1202, %v1201
        %v1216 = vpack.c.b16 %v1204, %v1203
        %v1217 = vpack.c.b16 %v1206, %v1205
        %v1218 = vpack.c.b16 %v1208, %v1207
        %v1219 = vpack.c.b16 %v1210, %v1209
        %v1220 = vpack.c.b16 %v1212, %v1211
        %1229 = vmatprep.subr.bf16.mxu0 0
        %1230 = vmatpush1.bf16.msra.mxu0 %v1213
        %1231 = vmatprep.subr.bf16.mxu0 0
        %1232 = vmatpush1.bf16.msra.mxu0 %v1214
        %1233 = vmatprep.subr.bf16.mxu0 0
        %1234 = vmatpush1.bf16.msra.mxu0 %v1215
        %1235 = vmatprep.subr.bf16.mxu0 0
        %1236 = vmatpush1.bf16.msra.mxu0 %v1216
        %1237 = vmatprep.subr.bf16.mxu0 0
        %1238 = vmatpush1.bf16.msra.mxu0 %v1217
        %1239 = vmatprep.subr.bf16.mxu0 0
        %1240 = vmatpush1.bf16.msra.mxu0 %v1218
        %1241 = vmatprep.subr.bf16.mxu0 0
        %1242 = vmatpush1.bf16.msra.mxu0 %v1219
        %1243 = vmatprep.subr.bf16.mxu0 0
        %1244 = vmatpush1.bf16.msra.mxu0 %v1220
        %1245 = vmatprep.subr.bf16.mxu0 0
        %1246 = vmatpush1.bf16.msra.mxu0 0
        %1247 = vmatprep.subr.bf16.mxu0 0
        %1248 = vmatpush1.bf16.msra.mxu0 0
        %1249 = vmatprep.subr.bf16.mxu0 0
        %1250 = vmatpush1.bf16.msra.mxu0 0
        %1251 = vmatprep.subr.bf16.mxu0 0
        %1252 = vmatpush1.bf16.msra.mxu0 0
        %1253 = vmatprep.subr.bf16.mxu0 0
        %1254 = vmatpush1.bf16.msra.mxu0 0
        %1255 = vmatprep.subr.bf16.mxu0 0
        %1256 = vmatpush1.bf16.msra.mxu0 0
        %1257 = vmatprep.subr.bf16.mxu0 0
        %1258 = vmatpush1.bf16.msra.mxu0 0
        %1259 = vmatprep.subr.bf16.mxu0 0
        %1260 = vmatpush1.bf16.msra.mxu0 0
        %1261 = vmatprep.mubr.bf16.mxu0 0
        %1262 = vmatmul.mubr.bf16.gmra.mrb[0].mxu0 %v1157
        %v1263 = vpop.f32.mrb[0].mxu0
        %v1264 = vadd.f32 %v1179, %v1263
        %v1265 = vpop.f32.mrb[0].mxu0
        %v1266 = vpop.f32.mrb[0].mxu0
        %v1267 = vpop.f32.mrb[0].mxu0
        %1268 = vdwg.mxu0
        %1269 = vst [vmem:[%s412] sm:$0xff] %v1264
        %s1270 = sand.u32 %s210, 1
        %s1271 = scalar_lea.sflag [#allocation5], %s1270
        %s1272 = sand.u32 %s210, 1
        %s1273 = smul.addr %s1272, 8
        %s1274 = scalar_lea.vmem [#allocation17], %s1273
        // Predicated region
        $region85: #{tpu_custom_call.1} parent=51 // pred_check
          %p1275 = pneg %p220
        $region86: #{tpu_custom_call.1} parent=51 // pred_check_branch
          %1277 = sbr.rel (%p1275) target = $region88
        $region87: #{tpu_custom_call.1} parent=51 // pred_region
          %s1279 = ssub.s32 128, 128
          %1280 = vsyncadd %s1271, %s1279
          %s1281 = smul.addr %s29, 128
          %s1282 = scalar_lea.hbm %s8, %s1281
          %s1284 = sshll.u32 %s1274, 4
          %s1285 = int_to_ptr.vmem [resolvable:$true] %s1284
          %1287 = dma.vmem_to_hbm [thread:$0]  %s1285, 128, %s1282, %s1271
        $region88: #{tpu_custom_call.1} parent=51 // pred_fallthru
          _
      $region52: #{tpu_custom_call.1} parent=5 // pred_fallthru
        _
      %p1288 = scmp.le.s32.totalorder 2, %s24
      // Predicated region
      $region89: #{tpu_custom_call.1} parent=5 // pred_check
        %p1289 = pneg %p1288
      $region90: #{tpu_custom_call.1} parent=5 // pred_check_branch
        %1291 = sbr.rel (%p1289) target = $region92
      $region91: #{tpu_custom_call.1} parent=5 // pred_region
        %s1292 = ssub.s32 %s24, 2
        // Predicated region
        $region93: #{tpu_custom_call.1} parent=91 // pred_check
          %p1293 = pneg %p226
        $region94: #{tpu_custom_call.1} parent=91 // pred_check_branch
          %1295 = sbr.rel (%p1293) target = $region96
        $region95: #{tpu_custom_call.1} parent=91 // pred_region
          %s1296 = sand.u32 %s211, 1
          %s1297 = scalar_lea.sflag [#allocation5], %s1296
          %s1298 = sand.u32 %s211, 1
          %s1299 = smul.addr %s1298, 8
          %s1300 = scalar_lea.vmem [#allocation17], %s1299
          %1301 = dma.done %s1297, 128
        $region96: #{tpu_custom_call.1} parent=91 // pred_fallthru
          _
      $region92: #{tpu_custom_call.1} parent=5 // pred_fallthru
        _
    $region6: #{tpu_custom_call.1} parent=1 // loop_footer
      %s28 = sadd.s32 1, %s24
    $region7: #{tpu_custom_call.1} parent=1 // loop_footer_branch
      %23 = sbr.rel target = $region3
    $region8: #{tpu_custom_call.1} parent=1 // loop_exit
      _
    %1302 = vsyncpa [#allocation4], 1
    %s1303 = scalar_lea.sflag [#allocation4], 1
    %1304 = vsyncpa %s1303, 1
    %1305 = vsyncpa [#allocation7], 1
    %1306 = vsyncpa [#allocation10], 1
    %1307 = vsyncpa [#allocation13], 1
    %1308 = vsyncpa [#allocation16], 1
    %1309 = vsyncpa [#allocation5], 1
    %s1310 = scalar_lea.sflag [#allocation5], 1
    %1311 = vsyncpa %s1310, 1

</llo_original>
